<compile_context>
chip_gen: v5e
topology: v5e:2x2
jax: 0.10.0
libtpu: 0.0.40
codegen_flags: <defaults>
</compile_context>

<pallas_src>
import functools

import jax
import jax.numpy as jnp
from jax import lax
from jax.experimental import pallas as pl
from jax.experimental.pallas import tpu as pltpu


# ----------------------------------------------------------------------------
# Fused kernel: encoder LSTM + decoder LSTM + final linear
# ----------------------------------------------------------------------------
def _seq2seq_kernel(x2d_ref, y2d_ref,
                    enc_wih_ref, enc_whh_ref, enc_b_ref,
                    dec_wih_ref, dec_whh_ref, dec_b_ref,
                    lin_w_ref, lin_b_ref,
                    h0_ref, c0_ref,
                    out_ref,
                    *, hidden_size, src_len, tgt_len, batch):
    H = hidden_size
    B = batch

    # g-gate lane mask: hoisted, computed ONCE and reused by every step
    # (JAX does not CSE broadcast_in_dim, so never build this inside the loop).
    lane = lax.broadcasted_iota(jnp.int32, (B, 4 * H), 1)
    g_mask = (lane >= 2 * H) & (lane < 3 * H)

    def lstm_step(xp, h_prev, c_prev, whh_bf16):
        # bf16 MXU operands, f32 accumulation; gate math / cell state stay f32.
        gates = xp + jnp.dot(h_prev.astype(jnp.bfloat16), whh_bf16,
                             preferred_element_type=jnp.float32)
        # 2 full-vreg EUP pushes (sigmoid + tanh on the whole (B, 4H) gates
        # vreg) instead of 4 quarter-filled ones; one cheap VALU select picks
        # the tanh lanes for the g gate.
        sig = jax.nn.sigmoid(gates)
        tnh = jnp.tanh(gates)
        act = jnp.where(g_mask, tnh, sig)
        i_g = act[:, 0 * H:1 * H]
        f_g = act[:, 1 * H:2 * H]
        g_g = act[:, 2 * H:3 * H]
        o_g = act[:, 3 * H:4 * H]
        c_new = f_g * c_prev + i_g * g_g
        h_new = o_g * jnp.tanh(c_new)
        return h_new, c_new

    # ---- Encoder ------------------------------------------------------------
    # Hoisted input projection: one (S*B, in) @ (in, 4H) bf16 MXU matmul,
    # bias broadcast done once; the result lives entirely in vregs.
    enc_whh = enc_whh_ref[...].astype(jnp.bfloat16)           # (H, 4H)
    xproj_enc = (jnp.dot(x2d_ref[...].astype(jnp.bfloat16),
                         enc_wih_ref[...].astype(jnp.bfloat16),
                         preferred_element_type=jnp.float32)
                 + enc_b_ref[...])                             # (S*B, 4H) f32

    h = h0_ref[...]
    c = c0_ref[...]
    for t in range(src_len):                  # statically unrolled recurrence
        h, c = lstm_step(xproj_enc[t * B:(t + 1) * B, :], h, c, enc_whh)

    # ---- Decoder (weights / projection loaded after the encoder loop) ------
    dec_whh = dec_whh_ref[...].astype(jnp.bfloat16)
    xproj_dec = (jnp.dot(y2d_ref[...].astype(jnp.bfloat16),
                         dec_wih_ref[...].astype(jnp.bfloat16),
                         preferred_element_type=jnp.float32)
                 + dec_b_ref[...])
    for t in range(tgt_len):
        h, c = lstm_step(xproj_dec[t * B:(t + 1) * B, :], h, c, dec_whh)

    # ---- Final linear: (batch, H) -> (batch, 1) via VPU mul + lane reduce ---
    out = jnp.sum(h * lin_w_ref[...], axis=-1, keepdims=True) + lin_b_ref[...]
    out_ref[...] = out.astype(out_ref.dtype)


# ----------------------------------------------------------------------------
# Wrapper
# ----------------------------------------------------------------------------
def seq2seq_forward(params, input_tensor, target_tensor, hn=None, cn=None):
    """Mirrors Seq2seq__.forward.

    input_tensor : (src_len, batch, input_size)
    target_tensor: (tgt_len, batch, tgt_input_size)
    returns      : (batch, 1)
    """
    src_len, batch, _ = input_tensor.shape
    tgt_len, batch_t, _ = target_tensor.shape
    assert batch == batch_t
    hidden = params["enc_w_hh"].shape[0]

    if hn is None or cn is None:
        # encoder.initHidden(batch_size) -> zeros
        hn = jnp.zeros((batch, hidden), jnp.float32)
        cn = jnp.zeros((batch, hidden), jnp.float32)

    # Host-side (free) flattening of time x batch so the hoisted input
    # projection inside the kernel is a plain 2-D matmul with no reshapes.
    x2d = input_tensor.reshape(src_len * batch, input_tensor.shape[-1])
    y2d = target_tensor.reshape(tgt_len * batch, target_tensor.shape[-1])

    kernel = functools.partial(
        _seq2seq_kernel, hidden_size=hidden, src_len=src_len,
        tgt_len=tgt_len, batch=batch)

    def full_spec(shape):
        return pl.BlockSpec(shape, lambda i: (0,) * len(shape))

    # NOTE: for large seq_len * batch * hidden this single-shot design should
    # be re-tiled over time chunks (accumulator pattern) and vmem_limit_bytes
    # set explicitly; at these sizes everything fits comfortably in VMEM.
    out = pl.pallas_call(
        kernel,
        out_shape=jax.ShapeDtypeStruct((batch, 1), jnp.float32),
        grid_spec=pltpu.PrefetchScalarGridSpec(
            num_scalar_prefetch=0,
            grid=(1,),
            in_specs=[
                full_spec(x2d.shape),                       # x (S*B, in)
                full_spec(y2d.shape),                       # y (T*B, in)
                full_spec(params["enc_w_ih"].shape),        # (in, 4H)
                full_spec(params["enc_w_hh"].shape),        # (H, 4H)
                full_spec(params["enc_b"].shape),           # (1, 4H)
                full_spec(params["dec_w_ih"].shape),
                full_spec(params["dec_w_hh"].shape),
                full_spec(params["dec_b"].shape),
                full_spec(params["lin_w"].shape),           # (1, H)
                full_spec(params["lin_b"].shape),           # (1, 1)
                full_spec((batch, hidden)),                 # h0
                full_spec((batch, hidden)),                 # c0
            ],
            out_specs=full_spec((batch, 1)),
        ),
    )(x2d, y2d,
      params["enc_w_ih"], params["enc_w_hh"], params["enc_b"],
      params["dec_w_ih"], params["dec_w_hh"], params["dec_b"],
      params["lin_w"], params["lin_b"], hn, cn)
    return out


def init_params(key, input_size, tgt_input_size, hidden_size):
    """Deterministic PyTorch-style uniform init U(-1/sqrt(H), 1/sqrt(H)).

    Weights stored PRE-TRANSPOSED for the kernel: w_ih (in, 4H), w_hh (H, 4H),
    gate order (i, f, g, o), bias = b_ih + b_hh combined; lin_w is the
    nn.Linear(H, 1) weight as a (1, H) row vector.
    """
    ks = jax.random.split(key, 8)
    bound = 1.0 / jnp.sqrt(jnp.float32(hidden_size))

    def u(k, shape):
        return jax.random.uniform(k, shape, jnp.float32, -bound, bound)

    return {
        "enc_w_ih": u(ks[0], (input_size, 4 * hidden_size)),
        "enc_w_hh": u(ks[1], (hidden_size, 4 * hidden_size)),
        "enc_b":    u(ks[2], (1, 4 * hidden_size)),
        "dec_w_ih": u(ks[3], (tgt_input_size, 4 * hidden_size)),
        "dec_w_hh": u(ks[4], (hidden_size, 4 * hidden_size)),
        "dec_b":    u(ks[5], (1, 4 * hidden_size)),
        "lin_w":    u(ks[6], (1, hidden_size)),
        "lin_b":    u(ks[7], (1, 1)),
    }


# ----------------------------------------------------------------------------
# Pure-JAX f32 reference (for a correctness sanity check)
# ----------------------------------------------------------------------------
def _reference(params, x, y, hn, cn):
    H = params["enc_w_hh"].shape[0]

    def lstm(seq, w_ih, w_hh, b, h, c):
        def step(carry, x_t):
            h, c = carry
            gates = x_t @ w_ih + h @ w_hh + b
            i = jax.nn.sigmoid(gates[:, 0 * H:1 * H])
            f = jax.nn.sigmoid(gates[:, 1 * H:2 * H])
            g = jnp.tanh(gates[:, 2 * H:3 * H])
            o = jax.nn.sigmoid(gates[:, 3 * H:4 * H])
            c = f * c + i * g
            h = o * jnp.tanh(c)
            return (h, c), None
        (h, c), _ = lax.scan(step, (h, c), seq)
        return h, c

    eh, ec = lstm(x, params["enc_w_ih"], params["enc_w_hh"], params["enc_b"],
                  hn, cn)
    dh, _ = lstm(y, params["dec_w_ih"], params["dec_w_hh"], params["dec_b"],
                 eh, ec)
    return dh @ params["lin_w"].T + params["lin_b"]


if __name__ == "__main__":
    key = jax.random.PRNGKey(0)
    k_p, k_x, k_y = jax.random.split(key, 3)

    batch = 8           # multiple of 8 -> fills sublanes
    hidden = 32         # 4H = 128 -> gate block spans exactly one lane tile
    input_size = 8      # encoder input feature size
    tgt_input_size = 8  # decoder input feature size
    src_len = 8
    tgt_len = 8

    params = init_params(k_p, input_size, tgt_input_size, hidden)

    input_tensor = jax.random.normal(
        k_x, (src_len, batch, input_size), jnp.float32)
    target_tensor = jax.random.normal(
        k_y, (tgt_len, batch, tgt_input_size), jnp.float32)

    out = seq2seq_forward(params, input_tensor, target_tensor)
    out = jax.block_until_ready(out)
    assert out.shape == (batch, 1), out.shape

    zeros = jnp.zeros((batch, hidden), jnp.float32)
    ref = _reference(params, input_tensor, target_tensor, zeros, zeros)
    # Tolerance widened (2e-3 -> 2e-2) because MXU operands are now bf16
    # (accumulation and all gate/cell math remain f32).
    assert jnp.allclose(out, ref, atol=2e-2, rtol=2e-2), (
        float(jnp.max(jnp.abs(out - ref))))

    print("KERNEL_OK")
</pallas_src>

<mosaic_0001>
module attributes {stable_mosaic.version = 11 : i64} {
  func.func @_seq2seq_kernel(%arg0: i32, %arg1: memref<64x8xf32, #tpu.memory_space<vmem>>, %arg2: memref<64x8xf32, #tpu.memory_space<vmem>>, %arg3: memref<8x128xf32, #tpu.memory_space<vmem>>, %arg4: memref<32x128xf32, #tpu.memory_space<vmem>>, %arg5: memref<1x128xf32, #tpu.memory_space<vmem>>, %arg6: memref<8x128xf32, #tpu.memory_space<vmem>>, %arg7: memref<32x128xf32, #tpu.memory_space<vmem>>, %arg8: memref<1x128xf32, #tpu.memory_space<vmem>>, %arg9: memref<1x32xf32, #tpu.memory_space<vmem>>, %arg10: memref<1x1xf32, #tpu.memory_space<vmem>>, %arg11: memref<8x32xf32, #tpu.memory_space<vmem>>, %arg12: memref<8x32xf32, #tpu.memory_space<vmem>>, %arg13: memref<8x1xf32, #tpu.memory_space<vmem>>) attributes {dimension_semantics = [#tpu.dimension_semantics<arbitrary>], iteration_bounds = array<i64: 1>, scalar_prefetch = 0 : i64, scratch_operands = 0 : i64, tpu.core_type = #tpu.core_type<tc>, window_params = [{pipeline_mode = #tpu.pipeline_mode<synchronous>, transform_indices = @transform_0, window_bounds = array<i64: 64, 8>}, {pipeline_mode = #tpu.pipeline_mode<synchronous>, transform_indices = @transform_1, window_bounds = array<i64: 64, 8>}, {pipeline_mode = #tpu.pipeline_mode<synchronous>, transform_indices = @transform_2, window_bounds = array<i64: 8, 128>}, {pipeline_mode = #tpu.pipeline_mode<synchronous>, transform_indices = @transform_3, window_bounds = array<i64: 32, 128>}, {pipeline_mode = #tpu.pipeline_mode<synchronous>, transform_indices = @transform_4, window_bounds = array<i64: 1, 128>}, {pipeline_mode = #tpu.pipeline_mode<synchronous>, transform_indices = @transform_5, window_bounds = array<i64: 8, 128>}, {pipeline_mode = #tpu.pipeline_mode<synchronous>, transform_indices = @transform_6, window_bounds = array<i64: 32, 128>}, {pipeline_mode = #tpu.pipeline_mode<synchronous>, transform_indices = @transform_7, window_bounds = array<i64: 1, 128>}, {pipeline_mode = #tpu.pipeline_mode<synchronous>, transform_indices = @transform_8, window_bounds = array<i64: 1, 32>}, {pipeline_mode = #tpu.pipeline_mode<synchronous>, transform_indices = @transform_9, window_bounds = array<i64: 1, 1>}, {pipeline_mode = #tpu.pipeline_mode<synchronous>, transform_indices = @transform_10, window_bounds = array<i64: 8, 32>}, {pipeline_mode = #tpu.pipeline_mode<synchronous>, transform_indices = @transform_11, window_bounds = array<i64: 8, 32>}, {pipeline_mode = #tpu.pipeline_mode<synchronous>, transform_indices = @transform_12, window_bounds = array<i64: 8, 1>}]} {
    %0 = tpu.iota {dimensions = array<i32: 1>} : vector<8x128xi32>
    %c64_i32 = arith.constant 64 : i32
    %1 = vector.broadcast %c64_i32 : i32 to vector<8x128xi32>
    %2 = arith.cmpi sge, %0, %1 : vector<8x128xi32>
    %c96_i32 = arith.constant 96 : i32
    %3 = vector.broadcast %c96_i32 : i32 to vector<8x128xi32>
    %4 = arith.cmpi slt, %0, %3 : vector<8x128xi32>
    %5 = arith.andi %2, %4 : vector<8x128xi1>
    %c0 = arith.constant 0 : index
    %c0_0 = arith.constant 0 : index
    %6 = vector.load %arg4[%c0, %c0_0] : memref<32x128xf32, #tpu.memory_space<vmem>>, vector<32x128xf32>
    %7 = arith.truncf %6 : vector<32x128xf32> to vector<32x128xbf16>
    %c0_1 = arith.constant 0 : index
    %c0_2 = arith.constant 0 : index
    %8 = vector.load %arg1[%c0_1, %c0_2] : memref<64x8xf32, #tpu.memory_space<vmem>>, vector<64x8xf32>
    %9 = arith.truncf %8 : vector<64x8xf32> to vector<64x8xbf16>
    %c0_3 = arith.constant 0 : index
    %c0_4 = arith.constant 0 : index
    %10 = vector.load %arg3[%c0_3, %c0_4] : memref<8x128xf32, #tpu.memory_space<vmem>>, vector<8x128xf32>
    %11 = arith.truncf %10 : vector<8x128xf32> to vector<8x128xbf16>
    %cst = arith.constant dense<0.000000e+00> : vector<64x128xf32>
    %12 = tpu.matmul %9, %11, %cst {dimension_numbers = #tpu.dot_dimension_numbers<[1], [0], [0], [1], [0, 0, 1, 1], [], []>} : vector<64x8xbf16>, vector<8x128xbf16>, vector<64x128xf32> -> vector<64x128xf32>
    %c0_5 = arith.constant 0 : index
    %c0_6 = arith.constant 0 : index
    %13 = vector.load %arg5[%c0_5, %c0_6] : memref<1x128xf32, #tpu.memory_space<vmem>>, vector<1x128xf32>
    %14 = vector.broadcast %13 : vector<1x128xf32> to vector<64x128xf32>
    %15 = arith.addf %12, %14 : vector<64x128xf32>
    %c0_7 = arith.constant 0 : index
    %c0_8 = arith.constant 0 : index
    %16 = vector.load %arg11[%c0_7, %c0_8] : memref<8x32xf32, #tpu.memory_space<vmem>>, vector<8x32xf32>
    %c0_9 = arith.constant 0 : index
    %c0_10 = arith.constant 0 : index
    %17 = vector.load %arg12[%c0_9, %c0_10] : memref<8x32xf32, #tpu.memory_space<vmem>>, vector<8x32xf32>
    %18 = vector.extract_strided_slice %15 {offsets = [0, 0], sizes = [8, 128], strides = [1, 1]} : vector<64x128xf32> to vector<8x128xf32>
    %19 = arith.truncf %16 : vector<8x32xf32> to vector<8x32xbf16>
    %cst_11 = arith.constant dense<0.000000e+00> : vector<8x128xf32>
    %20 = tpu.matmul %19, %7, %cst_11 {dimension_numbers = #tpu.dot_dimension_numbers<[1], [0], [0], [1], [0, 0, 1, 1], [], []>} : vector<8x32xbf16>, vector<32x128xbf16>, vector<8x128xf32> -> vector<8x128xf32>
    %21 = arith.addf %18, %20 : vector<8x128xf32>
    %22 = arith.negf %21 : vector<8x128xf32>
    %23 = math.exp %22 : vector<8x128xf32>
    %cst_12 = arith.constant 1.000000e+00 : f32
    %24 = vector.broadcast %cst_12 : f32 to vector<8x128xf32>
    %25 = arith.addf %24, %23 : vector<8x128xf32>
    %26 = arith.divf %24, %25 : vector<8x128xf32>
    %27 = math.tanh %21 : vector<8x128xf32>
    %28 = arith.select %5, %27, %26 : vector<8x128xi1>, vector<8x128xf32>
    %29 = vector.extract_strided_slice %28 {offsets = [0, 0], sizes = [8, 32], strides = [1, 1]} : vector<8x128xf32> to vector<8x32xf32>
    %30 = vector.extract_strided_slice %28 {offsets = [0, 32], sizes = [8, 32], strides = [1, 1]} : vector<8x128xf32> to vector<8x32xf32>
    %31 = vector.extract_strided_slice %28 {offsets = [0, 64], sizes = [8, 32], strides = [1, 1]} : vector<8x128xf32> to vector<8x32xf32>
    %32 = vector.extract_strided_slice %28 {offsets = [0, 96], sizes = [8, 32], strides = [1, 1]} : vector<8x128xf32> to vector<8x32xf32>
    %33 = arith.mulf %30, %17 : vector<8x32xf32>
    %34 = arith.mulf %29, %31 : vector<8x32xf32>
    %35 = arith.addf %33, %34 : vector<8x32xf32>
    %36 = math.tanh %35 : vector<8x32xf32>
    %37 = arith.mulf %32, %36 : vector<8x32xf32>
    %38 = vector.extract_strided_slice %15 {offsets = [8, 0], sizes = [8, 128], strides = [1, 1]} : vector<64x128xf32> to vector<8x128xf32>
    %39 = arith.truncf %37 : vector<8x32xf32> to vector<8x32xbf16>
    %cst_13 = arith.constant dense<0.000000e+00> : vector<8x128xf32>
    %40 = tpu.matmul %39, %7, %cst_13 {dimension_numbers = #tpu.dot_dimension_numbers<[1], [0], [0], [1], [0, 0, 1, 1], [], []>} : vector<8x32xbf16>, vector<32x128xbf16>, vector<8x128xf32> -> vector<8x128xf32>
    %41 = arith.addf %38, %40 : vector<8x128xf32>
    %42 = arith.negf %41 : vector<8x128xf32>
    %43 = math.exp %42 : vector<8x128xf32>
    %cst_14 = arith.constant 1.000000e+00 : f32
    %44 = vector.broadcast %cst_14 : f32 to vector<8x128xf32>
    %45 = arith.addf %44, %43 : vector<8x128xf32>
    %46 = arith.divf %44, %45 : vector<8x128xf32>
    %47 = math.tanh %41 : vector<8x128xf32>
    %48 = arith.select %5, %47, %46 : vector<8x128xi1>, vector<8x128xf32>
    %49 = vector.extract_strided_slice %48 {offsets = [0, 0], sizes = [8, 32], strides = [1, 1]} : vector<8x128xf32> to vector<8x32xf32>
    %50 = vector.extract_strided_slice %48 {offsets = [0, 32], sizes = [8, 32], strides = [1, 1]} : vector<8x128xf32> to vector<8x32xf32>
    %51 = vector.extract_strided_slice %48 {offsets = [0, 64], sizes = [8, 32], strides = [1, 1]} : vector<8x128xf32> to vector<8x32xf32>
    %52 = vector.extract_strided_slice %48 {offsets = [0, 96], sizes = [8, 32], strides = [1, 1]} : vector<8x128xf32> to vector<8x32xf32>
    %53 = arith.mulf %50, %35 : vector<8x32xf32>
    %54 = arith.mulf %49, %51 : vector<8x32xf32>
    %55 = arith.addf %53, %54 : vector<8x32xf32>
    %56 = math.tanh %55 : vector<8x32xf32>
    %57 = arith.mulf %52, %56 : vector<8x32xf32>
    %58 = vector.extract_strided_slice %15 {offsets = [16, 0], sizes = [8, 128], strides = [1, 1]} : vector<64x128xf32> to vector<8x128xf32>
    %59 = arith.truncf %57 : vector<8x32xf32> to vector<8x32xbf16>
    %cst_15 = arith.constant dense<0.000000e+00> : vector<8x128xf32>
    %60 = tpu.matmul %59, %7, %cst_15 {dimension_numbers = #tpu.dot_dimension_numbers<[1], [0], [0], [1], [0, 0, 1, 1], [], []>} : vector<8x32xbf16>, vector<32x128xbf16>, vector<8x128xf32> -> vector<8x128xf32>
    %61 = arith.addf %58, %60 : vector<8x128xf32>
    %62 = arith.negf %61 : vector<8x128xf32>
    %63 = math.exp %62 : vector<8x128xf32>
    %cst_16 = arith.constant 1.000000e+00 : f32
    %64 = vector.broadcast %cst_16 : f32 to vector<8x128xf32>
    %65 = arith.addf %64, %63 : vector<8x128xf32>
    %66 = arith.divf %64, %65 : vector<8x128xf32>
    %67 = math.tanh %61 : vector<8x128xf32>
    %68 = arith.select %5, %67, %66 : vector<8x128xi1>, vector<8x128xf32>
    %69 = vector.extract_strided_slice %68 {offsets = [0, 0], sizes = [8, 32], strides = [1, 1]} : vector<8x128xf32> to vector<8x32xf32>
    %70 = vector.extract_strided_slice %68 {offsets = [0, 32], sizes = [8, 32], strides = [1, 1]} : vector<8x128xf32> to vector<8x32xf32>
    %71 = vector.extract_strided_slice %68 {offsets = [0, 64], sizes = [8, 32], strides = [1, 1]} : vector<8x128xf32> to vector<8x32xf32>
    %72 = vector.extract_strided_slice %68 {offsets = [0, 96], sizes = [8, 32], strides = [1, 1]} : vector<8x128xf32> to vector<8x32xf32>
    %73 = arith.mulf %70, %55 : vector<8x32xf32>
    %74 = arith.mulf %69, %71 : vector<8x32xf32>
    %75 = arith.addf %73, %74 : vector<8x32xf32>
    %76 = math.tanh %75 : vector<8x32xf32>
    %77 = arith.mulf %72, %76 : vector<8x32xf32>
    %78 = vector.extract_strided_slice %15 {offsets = [24, 0], sizes = [8, 128], strides = [1, 1]} : vector<64x128xf32> to vector<8x128xf32>
    %79 = arith.truncf %77 : vector<8x32xf32> to vector<8x32xbf16>
    %cst_17 = arith.constant dense<0.000000e+00> : vector<8x128xf32>
    %80 = tpu.matmul %79, %7, %cst_17 {dimension_numbers = #tpu.dot_dimension_numbers<[1], [0], [0], [1], [0, 0, 1, 1], [], []>} : vector<8x32xbf16>, vector<32x128xbf16>, vector<8x128xf32> -> vector<8x128xf32>
    %81 = arith.addf %78, %80 : vector<8x128xf32>
    %82 = arith.negf %81 : vector<8x128xf32>
    %83 = math.exp %82 : vector<8x128xf32>
    %cst_18 = arith.constant 1.000000e+00 : f32
    %84 = vector.broadcast %cst_18 : f32 to vector<8x128xf32>
    %85 = arith.addf %84, %83 : vector<8x128xf32>
    %86 = arith.divf %84, %85 : vector<8x128xf32>
    %87 = math.tanh %81 : vector<8x128xf32>
    %88 = arith.select %5, %87, %86 : vector<8x128xi1>, vector<8x128xf32>
    %89 = vector.extract_strided_slice %88 {offsets = [0, 0], sizes = [8, 32], strides = [1, 1]} : vector<8x128xf32> to vector<8x32xf32>
    %90 = vector.extract_strided_slice %88 {offsets = [0, 32], sizes = [8, 32], strides = [1, 1]} : vector<8x128xf32> to vector<8x32xf32>
    %91 = vector.extract_strided_slice %88 {offsets = [0, 64], sizes = [8, 32], strides = [1, 1]} : vector<8x128xf32> to vector<8x32xf32>
    %92 = vector.extract_strided_slice %88 {offsets = [0, 96], sizes = [8, 32], strides = [1, 1]} : vector<8x128xf32> to vector<8x32xf32>
    %93 = arith.mulf %90, %75 : vector<8x32xf32>
    %94 = arith.mulf %89, %91 : vector<8x32xf32>
    %95 = arith.addf %93, %94 : vector<8x32xf32>
    %96 = math.tanh %95 : vector<8x32xf32>
    %97 = arith.mulf %92, %96 : vector<8x32xf32>
    %98 = vector.extract_strided_slice %15 {offsets = [32, 0], sizes = [8, 128], strides = [1, 1]} : vector<64x128xf32> to vector<8x128xf32>
    %99 = arith.truncf %97 : vector<8x32xf32> to vector<8x32xbf16>
    %cst_19 = arith.constant dense<0.000000e+00> : vector<8x128xf32>
    %100 = tpu.matmul %99, %7, %cst_19 {dimension_numbers = #tpu.dot_dimension_numbers<[1], [0], [0], [1], [0, 0, 1, 1], [], []>} : vector<8x32xbf16>, vector<32x128xbf16>, vector<8x128xf32> -> vector<8x128xf32>
    %101 = arith.addf %98, %100 : vector<8x128xf32>
    %102 = arith.negf %101 : vector<8x128xf32>
    %103 = math.exp %102 : vector<8x128xf32>
    %cst_20 = arith.constant 1.000000e+00 : f32
    %104 = vector.broadcast %cst_20 : f32 to vector<8x128xf32>
    %105 = arith.addf %104, %103 : vector<8x128xf32>
    %106 = arith.divf %104, %105 : vector<8x128xf32>
    %107 = math.tanh %101 : vector<8x128xf32>
    %108 = arith.select %5, %107, %106 : vector<8x128xi1>, vector<8x128xf32>
    %109 = vector.extract_strided_slice %108 {offsets = [0, 0], sizes = [8, 32], strides = [1, 1]} : vector<8x128xf32> to vector<8x32xf32>
    %110 = vector.extract_strided_slice %108 {offsets = [0, 32], sizes = [8, 32], strides = [1, 1]} : vector<8x128xf32> to vector<8x32xf32>
    %111 = vector.extract_strided_slice %108 {offsets = [0, 64], sizes = [8, 32], strides = [1, 1]} : vector<8x128xf32> to vector<8x32xf32>
    %112 = vector.extract_strided_slice %108 {offsets = [0, 96], sizes = [8, 32], strides = [1, 1]} : vector<8x128xf32> to vector<8x32xf32>
    %113 = arith.mulf %110, %95 : vector<8x32xf32>
    %114 = arith.mulf %109, %111 : vector<8x32xf32>
    %115 = arith.addf %113, %114 : vector<8x32xf32>
    %116 = math.tanh %115 : vector<8x32xf32>
    %117 = arith.mulf %112, %116 : vector<8x32xf32>
    %118 = vector.extract_strided_slice %15 {offsets = [40, 0], sizes = [8, 128], strides = [1, 1]} : vector<64x128xf32> to vector<8x128xf32>
    %119 = arith.truncf %117 : vector<8x32xf32> to vector<8x32xbf16>
    %cst_21 = arith.constant dense<0.000000e+00> : vector<8x128xf32>
    %120 = tpu.matmul %119, %7, %cst_21 {dimension_numbers = #tpu.dot_dimension_numbers<[1], [0], [0], [1], [0, 0, 1, 1], [], []>} : vector<8x32xbf16>, vector<32x128xbf16>, vector<8x128xf32> -> vector<8x128xf32>
    %121 = arith.addf %118, %120 : vector<8x128xf32>
    %122 = arith.negf %121 : vector<8x128xf32>
    %123 = math.exp %122 : vector<8x128xf32>
    %cst_22 = arith.constant 1.000000e+00 : f32
    %124 = vector.broadcast %cst_22 : f32 to vector<8x128xf32>
    %125 = arith.addf %124, %123 : vector<8x128xf32>
    %126 = arith.divf %124, %125 : vector<8x128xf32>
    %127 = math.tanh %121 : vector<8x128xf32>
    %128 = arith.select %5, %127, %126 : vector<8x128xi1>, vector<8x128xf32>
    %129 = vector.extract_strided_slice %128 {offsets = [0, 0], sizes = [8, 32], strides = [1, 1]} : vector<8x128xf32> to vector<8x32xf32>
    %130 = vector.extract_strided_slice %128 {offsets = [0, 32], sizes = [8, 32], strides = [1, 1]} : vector<8x128xf32> to vector<8x32xf32>
    %131 = vector.extract_strided_slice %128 {offsets = [0, 64], sizes = [8, 32], strides = [1, 1]} : vector<8x128xf32> to vector<8x32xf32>
    %132 = vector.extract_strided_slice %128 {offsets = [0, 96], sizes = [8, 32], strides = [1, 1]} : vector<8x128xf32> to vector<8x32xf32>
    %133 = arith.mulf %130, %115 : vector<8x32xf32>
    %134 = arith.mulf %129, %131 : vector<8x32xf32>
    %135 = arith.addf %133, %134 : vector<8x32xf32>
    %136 = math.tanh %135 : vector<8x32xf32>
    %137 = arith.mulf %132, %136 : vector<8x32xf32>
    %138 = vector.extract_strided_slice %15 {offsets = [48, 0], sizes = [8, 128], strides = [1, 1]} : vector<64x128xf32> to vector<8x128xf32>
    %139 = arith.truncf %137 : vector<8x32xf32> to vector<8x32xbf16>
    %cst_23 = arith.constant dense<0.000000e+00> : vector<8x128xf32>
    %140 = tpu.matmul %139, %7, %cst_23 {dimension_numbers = #tpu.dot_dimension_numbers<[1], [0], [0], [1], [0, 0, 1, 1], [], []>} : vector<8x32xbf16>, vector<32x128xbf16>, vector<8x128xf32> -> vector<8x128xf32>
    %141 = arith.addf %138, %140 : vector<8x128xf32>
    %142 = arith.negf %141 : vector<8x128xf32>
    %143 = math.exp %142 : vector<8x128xf32>
    %cst_24 = arith.constant 1.000000e+00 : f32
    %144 = vector.broadcast %cst_24 : f32 to vector<8x128xf32>
    %145 = arith.addf %144, %143 : vector<8x128xf32>
    %146 = arith.divf %144, %145 : vector<8x128xf32>
    %147 = math.tanh %141 : vector<8x128xf32>
    %148 = arith.select %5, %147, %146 : vector<8x128xi1>, vector<8x128xf32>
    %149 = vector.extract_strided_slice %148 {offsets = [0, 0], sizes = [8, 32], strides = [1, 1]} : vector<8x128xf32> to vector<8x32xf32>
    %150 = vector.extract_strided_slice %148 {offsets = [0, 32], sizes = [8, 32], strides = [1, 1]} : vector<8x128xf32> to vector<8x32xf32>
    %151 = vector.extract_strided_slice %148 {offsets = [0, 64], sizes = [8, 32], strides = [1, 1]} : vector<8x128xf32> to vector<8x32xf32>
    %152 = vector.extract_strided_slice %148 {offsets = [0, 96], sizes = [8, 32], strides = [1, 1]} : vector<8x128xf32> to vector<8x32xf32>
    %153 = arith.mulf %150, %135 : vector<8x32xf32>
    %154 = arith.mulf %149, %151 : vector<8x32xf32>
    %155 = arith.addf %153, %154 : vector<8x32xf32>
    %156 = math.tanh %155 : vector<8x32xf32>
    %157 = arith.mulf %152, %156 : vector<8x32xf32>
    %158 = vector.extract_strided_slice %15 {offsets = [56, 0], sizes = [8, 128], strides = [1, 1]} : vector<64x128xf32> to vector<8x128xf32>
    %159 = arith.truncf %157 : vector<8x32xf32> to vector<8x32xbf16>
    %cst_25 = arith.constant dense<0.000000e+00> : vector<8x128xf32>
    %160 = tpu.matmul %159, %7, %cst_25 {dimension_numbers = #tpu.dot_dimension_numbers<[1], [0], [0], [1], [0, 0, 1, 1], [], []>} : vector<8x32xbf16>, vector<32x128xbf16>, vector<8x128xf32> -> vector<8x128xf32>
    %161 = arith.addf %158, %160 : vector<8x128xf32>
    %162 = arith.negf %161 : vector<8x128xf32>
    %163 = math.exp %162 : vector<8x128xf32>
    %cst_26 = arith.constant 1.000000e+00 : f32
    %164 = vector.broadcast %cst_26 : f32 to vector<8x128xf32>
    %165 = arith.addf %164, %163 : vector<8x128xf32>
    %166 = arith.divf %164, %165 : vector<8x128xf32>
    %167 = math.tanh %161 : vector<8x128xf32>
    %168 = arith.select %5, %167, %166 : vector<8x128xi1>, vector<8x128xf32>
    %169 = vector.extract_strided_slice %168 {offsets = [0, 0], sizes = [8, 32], strides = [1, 1]} : vector<8x128xf32> to vector<8x32xf32>
    %170 = vector.extract_strided_slice %168 {offsets = [0, 32], sizes = [8, 32], strides = [1, 1]} : vector<8x128xf32> to vector<8x32xf32>
    %171 = vector.extract_strided_slice %168 {offsets = [0, 64], sizes = [8, 32], strides = [1, 1]} : vector<8x128xf32> to vector<8x32xf32>
    %172 = vector.extract_strided_slice %168 {offsets = [0, 96], sizes = [8, 32], strides = [1, 1]} : vector<8x128xf32> to vector<8x32xf32>
    %173 = arith.mulf %170, %155 : vector<8x32xf32>
    %174 = arith.mulf %169, %171 : vector<8x32xf32>
    %175 = arith.addf %173, %174 : vector<8x32xf32>
    %176 = math.tanh %175 : vector<8x32xf32>
    %177 = arith.mulf %172, %176 : vector<8x32xf32>
    %c0_27 = arith.constant 0 : index
    %c0_28 = arith.constant 0 : index
    %178 = vector.load %arg7[%c0_27, %c0_28] : memref<32x128xf32, #tpu.memory_space<vmem>>, vector<32x128xf32>
    %179 = arith.truncf %178 : vector<32x128xf32> to vector<32x128xbf16>
    %c0_29 = arith.constant 0 : index
    %c0_30 = arith.constant 0 : index
    %180 = vector.load %arg2[%c0_29, %c0_30] : memref<64x8xf32, #tpu.memory_space<vmem>>, vector<64x8xf32>
    %181 = arith.truncf %180 : vector<64x8xf32> to vector<64x8xbf16>
    %c0_31 = arith.constant 0 : index
    %c0_32 = arith.constant 0 : index
    %182 = vector.load %arg6[%c0_31, %c0_32] : memref<8x128xf32, #tpu.memory_space<vmem>>, vector<8x128xf32>
    %183 = arith.truncf %182 : vector<8x128xf32> to vector<8x128xbf16>
    %cst_33 = arith.constant dense<0.000000e+00> : vector<64x128xf32>
    %184 = tpu.matmul %181, %183, %cst_33 {dimension_numbers = #tpu.dot_dimension_numbers<[1], [0], [0], [1], [0, 0, 1, 1], [], []>} : vector<64x8xbf16>, vector<8x128xbf16>, vector<64x128xf32> -> vector<64x128xf32>
    %c0_34 = arith.constant 0 : index
    %c0_35 = arith.constant 0 : index
    %185 = vector.load %arg8[%c0_34, %c0_35] : memref<1x128xf32, #tpu.memory_space<vmem>>, vector<1x128xf32>
    %186 = vector.broadcast %185 : vector<1x128xf32> to vector<64x128xf32>
    %187 = arith.addf %184, %186 : vector<64x128xf32>
    %188 = vector.extract_strided_slice %187 {offsets = [0, 0], sizes = [8, 128], strides = [1, 1]} : vector<64x128xf32> to vector<8x128xf32>
    %189 = arith.truncf %177 : vector<8x32xf32> to vector<8x32xbf16>
    %cst_36 = arith.constant dense<0.000000e+00> : vector<8x128xf32>
    %190 = tpu.matmul %189, %179, %cst_36 {dimension_numbers = #tpu.dot_dimension_numbers<[1], [0], [0], [1], [0, 0, 1, 1], [], []>} : vector<8x32xbf16>, vector<32x128xbf16>, vector<8x128xf32> -> vector<8x128xf32>
    %191 = arith.addf %188, %190 : vector<8x128xf32>
    %192 = arith.negf %191 : vector<8x128xf32>
    %193 = math.exp %192 : vector<8x128xf32>
    %cst_37 = arith.constant 1.000000e+00 : f32
    %194 = vector.broadcast %cst_37 : f32 to vector<8x128xf32>
    %195 = arith.addf %194, %193 : vector<8x128xf32>
    %196 = arith.divf %194, %195 : vector<8x128xf32>
    %197 = math.tanh %191 : vector<8x128xf32>
    %198 = arith.select %5, %197, %196 : vector<8x128xi1>, vector<8x128xf32>
    %199 = vector.extract_strided_slice %198 {offsets = [0, 0], sizes = [8, 32], strides = [1, 1]} : vector<8x128xf32> to vector<8x32xf32>
    %200 = vector.extract_strided_slice %198 {offsets = [0, 32], sizes = [8, 32], strides = [1, 1]} : vector<8x128xf32> to vector<8x32xf32>
    %201 = vector.extract_strided_slice %198 {offsets = [0, 64], sizes = [8, 32], strides = [1, 1]} : vector<8x128xf32> to vector<8x32xf32>
    %202 = vector.extract_strided_slice %198 {offsets = [0, 96], sizes = [8, 32], strides = [1, 1]} : vector<8x128xf32> to vector<8x32xf32>
    %203 = arith.mulf %200, %175 : vector<8x32xf32>
    %204 = arith.mulf %199, %201 : vector<8x32xf32>
    %205 = arith.addf %203, %204 : vector<8x32xf32>
    %206 = math.tanh %205 : vector<8x32xf32>
    %207 = arith.mulf %202, %206 : vector<8x32xf32>
    %208 = vector.extract_strided_slice %187 {offsets = [8, 0], sizes = [8, 128], strides = [1, 1]} : vector<64x128xf32> to vector<8x128xf32>
    %209 = arith.truncf %207 : vector<8x32xf32> to vector<8x32xbf16>
    %cst_38 = arith.constant dense<0.000000e+00> : vector<8x128xf32>
    %210 = tpu.matmul %209, %179, %cst_38 {dimension_numbers = #tpu.dot_dimension_numbers<[1], [0], [0], [1], [0, 0, 1, 1], [], []>} : vector<8x32xbf16>, vector<32x128xbf16>, vector<8x128xf32> -> vector<8x128xf32>
    %211 = arith.addf %208, %210 : vector<8x128xf32>
    %212 = arith.negf %211 : vector<8x128xf32>
    %213 = math.exp %212 : vector<8x128xf32>
    %cst_39 = arith.constant 1.000000e+00 : f32
    %214 = vector.broadcast %cst_39 : f32 to vector<8x128xf32>
    %215 = arith.addf %214, %213 : vector<8x128xf32>
    %216 = arith.divf %214, %215 : vector<8x128xf32>
    %217 = math.tanh %211 : vector<8x128xf32>
    %218 = arith.select %5, %217, %216 : vector<8x128xi1>, vector<8x128xf32>
    %219 = vector.extract_strided_slice %218 {offsets = [0, 0], sizes = [8, 32], strides = [1, 1]} : vector<8x128xf32> to vector<8x32xf32>
    %220 = vector.extract_strided_slice %218 {offsets = [0, 32], sizes = [8, 32], strides = [1, 1]} : vector<8x128xf32> to vector<8x32xf32>
    %221 = vector.extract_strided_slice %218 {offsets = [0, 64], sizes = [8, 32], strides = [1, 1]} : vector<8x128xf32> to vector<8x32xf32>
    %222 = vector.extract_strided_slice %218 {offsets = [0, 96], sizes = [8, 32], strides = [1, 1]} : vector<8x128xf32> to vector<8x32xf32>
    %223 = arith.mulf %220, %205 : vector<8x32xf32>
    %224 = arith.mulf %219, %221 : vector<8x32xf32>
    %225 = arith.addf %223, %224 : vector<8x32xf32>
    %226 = math.tanh %225 : vector<8x32xf32>
    %227 = arith.mulf %222, %226 : vector<8x32xf32>
    %228 = vector.extract_strided_slice %187 {offsets = [16, 0], sizes = [8, 128], strides = [1, 1]} : vector<64x128xf32> to vector<8x128xf32>
    %229 = arith.truncf %227 : vector<8x32xf32> to vector<8x32xbf16>
    %cst_40 = arith.constant dense<0.000000e+00> : vector<8x128xf32>
    %230 = tpu.matmul %229, %179, %cst_40 {dimension_numbers = #tpu.dot_dimension_numbers<[1], [0], [0], [1], [0, 0, 1, 1], [], []>} : vector<8x32xbf16>, vector<32x128xbf16>, vector<8x128xf32> -> vector<8x128xf32>
    %231 = arith.addf %228, %230 : vector<8x128xf32>
    %232 = arith.negf %231 : vector<8x128xf32>
    %233 = math.exp %232 : vector<8x128xf32>
    %cst_41 = arith.constant 1.000000e+00 : f32
    %234 = vector.broadcast %cst_41 : f32 to vector<8x128xf32>
    %235 = arith.addf %234, %233 : vector<8x128xf32>
    %236 = arith.divf %234, %235 : vector<8x128xf32>
    %237 = math.tanh %231 : vector<8x128xf32>
    %238 = arith.select %5, %237, %236 : vector<8x128xi1>, vector<8x128xf32>
    %239 = vector.extract_strided_slice %238 {offsets = [0, 0], sizes = [8, 32], strides = [1, 1]} : vector<8x128xf32> to vector<8x32xf32>
    %240 = vector.extract_strided_slice %238 {offsets = [0, 32], sizes = [8, 32], strides = [1, 1]} : vector<8x128xf32> to vector<8x32xf32>
    %241 = vector.extract_strided_slice %238 {offsets = [0, 64], sizes = [8, 32], strides = [1, 1]} : vector<8x128xf32> to vector<8x32xf32>
    %242 = vector.extract_strided_slice %238 {offsets = [0, 96], sizes = [8, 32], strides = [1, 1]} : vector<8x128xf32> to vector<8x32xf32>
    %243 = arith.mulf %240, %225 : vector<8x32xf32>
    %244 = arith.mulf %239, %241 : vector<8x32xf32>
    %245 = arith.addf %243, %244 : vector<8x32xf32>
    %246 = math.tanh %245 : vector<8x32xf32>
    %247 = arith.mulf %242, %246 : vector<8x32xf32>
    %248 = vector.extract_strided_slice %187 {offsets = [24, 0], sizes = [8, 128], strides = [1, 1]} : vector<64x128xf32> to vector<8x128xf32>
    %249 = arith.truncf %247 : vector<8x32xf32> to vector<8x32xbf16>
    %cst_42 = arith.constant dense<0.000000e+00> : vector<8x128xf32>
    %250 = tpu.matmul %249, %179, %cst_42 {dimension_numbers = #tpu.dot_dimension_numbers<[1], [0], [0], [1], [0, 0, 1, 1], [], []>} : vector<8x32xbf16>, vector<32x128xbf16>, vector<8x128xf32> -> vector<8x128xf32>
    %251 = arith.addf %248, %250 : vector<8x128xf32>
    %252 = arith.negf %251 : vector<8x128xf32>
    %253 = math.exp %252 : vector<8x128xf32>
    %cst_43 = arith.constant 1.000000e+00 : f32
    %254 = vector.broadcast %cst_43 : f32 to vector<8x128xf32>
    %255 = arith.addf %254, %253 : vector<8x128xf32>
    %256 = arith.divf %254, %255 : vector<8x128xf32>
    %257 = math.tanh %251 : vector<8x128xf32>
    %258 = arith.select %5, %257, %256 : vector<8x128xi1>, vector<8x128xf32>
    %259 = vector.extract_strided_slice %258 {offsets = [0, 0], sizes = [8, 32], strides = [1, 1]} : vector<8x128xf32> to vector<8x32xf32>
    %260 = vector.extract_strided_slice %258 {offsets = [0, 32], sizes = [8, 32], strides = [1, 1]} : vector<8x128xf32> to vector<8x32xf32>
    %261 = vector.extract_strided_slice %258 {offsets = [0, 64], sizes = [8, 32], strides = [1, 1]} : vector<8x128xf32> to vector<8x32xf32>
    %262 = vector.extract_strided_slice %258 {offsets = [0, 96], sizes = [8, 32], strides = [1, 1]} : vector<8x128xf32> to vector<8x32xf32>
    %263 = arith.mulf %260, %245 : vector<8x32xf32>
    %264 = arith.mulf %259, %261 : vector<8x32xf32>
    %265 = arith.addf %263, %264 : vector<8x32xf32>
    %266 = math.tanh %265 : vector<8x32xf32>
    %267 = arith.mulf %262, %266 : vector<8x32xf32>
    %268 = vector.extract_strided_slice %187 {offsets = [32, 0], sizes = [8, 128], strides = [1, 1]} : vector<64x128xf32> to vector<8x128xf32>
    %269 = arith.truncf %267 : vector<8x32xf32> to vector<8x32xbf16>
    %cst_44 = arith.constant dense<0.000000e+00> : vector<8x128xf32>
    %270 = tpu.matmul %269, %179, %cst_44 {dimension_numbers = #tpu.dot_dimension_numbers<[1], [0], [0], [1], [0, 0, 1, 1], [], []>} : vector<8x32xbf16>, vector<32x128xbf16>, vector<8x128xf32> -> vector<8x128xf32>
    %271 = arith.addf %268, %270 : vector<8x128xf32>
    %272 = arith.negf %271 : vector<8x128xf32>
    %273 = math.exp %272 : vector<8x128xf32>
    %cst_45 = arith.constant 1.000000e+00 : f32
    %274 = vector.broadcast %cst_45 : f32 to vector<8x128xf32>
    %275 = arith.addf %274, %273 : vector<8x128xf32>
    %276 = arith.divf %274, %275 : vector<8x128xf32>
    %277 = math.tanh %271 : vector<8x128xf32>
    %278 = arith.select %5, %277, %276 : vector<8x128xi1>, vector<8x128xf32>
    %279 = vector.extract_strided_slice %278 {offsets = [0, 0], sizes = [8, 32], strides = [1, 1]} : vector<8x128xf32> to vector<8x32xf32>
    %280 = vector.extract_strided_slice %278 {offsets = [0, 32], sizes = [8, 32], strides = [1, 1]} : vector<8x128xf32> to vector<8x32xf32>
    %281 = vector.extract_strided_slice %278 {offsets = [0, 64], sizes = [8, 32], strides = [1, 1]} : vector<8x128xf32> to vector<8x32xf32>
    %282 = vector.extract_strided_slice %278 {offsets = [0, 96], sizes = [8, 32], strides = [1, 1]} : vector<8x128xf32> to vector<8x32xf32>
    %283 = arith.mulf %280, %265 : vector<8x32xf32>
    %284 = arith.mulf %279, %281 : vector<8x32xf32>
    %285 = arith.addf %283, %284 : vector<8x32xf32>
    %286 = math.tanh %285 : vector<8x32xf32>
    %287 = arith.mulf %282, %286 : vector<8x32xf32>
    %288 = vector.extract_strided_slice %187 {offsets = [40, 0], sizes = [8, 128], strides = [1, 1]} : vector<64x128xf32> to vector<8x128xf32>
    %289 = arith.truncf %287 : vector<8x32xf32> to vector<8x32xbf16>
    %cst_46 = arith.constant dense<0.000000e+00> : vector<8x128xf32>
    %290 = tpu.matmul %289, %179, %cst_46 {dimension_numbers = #tpu.dot_dimension_numbers<[1], [0], [0], [1], [0, 0, 1, 1], [], []>} : vector<8x32xbf16>, vector<32x128xbf16>, vector<8x128xf32> -> vector<8x128xf32>
    %291 = arith.addf %288, %290 : vector<8x128xf32>
    %292 = arith.negf %291 : vector<8x128xf32>
    %293 = math.exp %292 : vector<8x128xf32>
    %cst_47 = arith.constant 1.000000e+00 : f32
    %294 = vector.broadcast %cst_47 : f32 to vector<8x128xf32>
    %295 = arith.addf %294, %293 : vector<8x128xf32>
    %296 = arith.divf %294, %295 : vector<8x128xf32>
    %297 = math.tanh %291 : vector<8x128xf32>
    %298 = arith.select %5, %297, %296 : vector<8x128xi1>, vector<8x128xf32>
    %299 = vector.extract_strided_slice %298 {offsets = [0, 0], sizes = [8, 32], strides = [1, 1]} : vector<8x128xf32> to vector<8x32xf32>
    %300 = vector.extract_strided_slice %298 {offsets = [0, 32], sizes = [8, 32], strides = [1, 1]} : vector<8x128xf32> to vector<8x32xf32>
    %301 = vector.extract_strided_slice %298 {offsets = [0, 64], sizes = [8, 32], strides = [1, 1]} : vector<8x128xf32> to vector<8x32xf32>
    %302 = vector.extract_strided_slice %298 {offsets = [0, 96], sizes = [8, 32], strides = [1, 1]} : vector<8x128xf32> to vector<8x32xf32>
    %303 = arith.mulf %300, %285 : vector<8x32xf32>
    %304 = arith.mulf %299, %301 : vector<8x32xf32>
    %305 = arith.addf %303, %304 : vector<8x32xf32>
    %306 = math.tanh %305 : vector<8x32xf32>
    %307 = arith.mulf %302, %306 : vector<8x32xf32>
    %308 = vector.extract_strided_slice %187 {offsets = [48, 0], sizes = [8, 128], strides = [1, 1]} : vector<64x128xf32> to vector<8x128xf32>
    %309 = arith.truncf %307 : vector<8x32xf32> to vector<8x32xbf16>
    %cst_48 = arith.constant dense<0.000000e+00> : vector<8x128xf32>
    %310 = tpu.matmul %309, %179, %cst_48 {dimension_numbers = #tpu.dot_dimension_numbers<[1], [0], [0], [1], [0, 0, 1, 1], [], []>} : vector<8x32xbf16>, vector<32x128xbf16>, vector<8x128xf32> -> vector<8x128xf32>
    %311 = arith.addf %308, %310 : vector<8x128xf32>
    %312 = arith.negf %311 : vector<8x128xf32>
    %313 = math.exp %312 : vector<8x128xf32>
    %cst_49 = arith.constant 1.000000e+00 : f32
    %314 = vector.broadcast %cst_49 : f32 to vector<8x128xf32>
    %315 = arith.addf %314, %313 : vector<8x128xf32>
    %316 = arith.divf %314, %315 : vector<8x128xf32>
    %317 = math.tanh %311 : vector<8x128xf32>
    %318 = arith.select %5, %317, %316 : vector<8x128xi1>, vector<8x128xf32>
    %319 = vector.extract_strided_slice %318 {offsets = [0, 0], sizes = [8, 32], strides = [1, 1]} : vector<8x128xf32> to vector<8x32xf32>
    %320 = vector.extract_strided_slice %318 {offsets = [0, 32], sizes = [8, 32], strides = [1, 1]} : vector<8x128xf32> to vector<8x32xf32>
    %321 = vector.extract_strided_slice %318 {offsets = [0, 64], sizes = [8, 32], strides = [1, 1]} : vector<8x128xf32> to vector<8x32xf32>
    %322 = vector.extract_strided_slice %318 {offsets = [0, 96], sizes = [8, 32], strides = [1, 1]} : vector<8x128xf32> to vector<8x32xf32>
    %323 = arith.mulf %320, %305 : vector<8x32xf32>
    %324 = arith.mulf %319, %321 : vector<8x32xf32>
    %325 = arith.addf %323, %324 : vector<8x32xf32>
    %326 = math.tanh %325 : vector<8x32xf32>
    %327 = arith.mulf %322, %326 : vector<8x32xf32>
    %328 = vector.extract_strided_slice %187 {offsets = [56, 0], sizes = [8, 128], strides = [1, 1]} : vector<64x128xf32> to vector<8x128xf32>
    %329 = arith.truncf %327 : vector<8x32xf32> to vector<8x32xbf16>
    %cst_50 = arith.constant dense<0.000000e+00> : vector<8x128xf32>
    %330 = tpu.matmul %329, %179, %cst_50 {dimension_numbers = #tpu.dot_dimension_numbers<[1], [0], [0], [1], [0, 0, 1, 1], [], []>} : vector<8x32xbf16>, vector<32x128xbf16>, vector<8x128xf32> -> vector<8x128xf32>
    %331 = arith.addf %328, %330 : vector<8x128xf32>
    %332 = arith.negf %331 : vector<8x128xf32>
    %333 = math.exp %332 : vector<8x128xf32>
    %cst_51 = arith.constant 1.000000e+00 : f32
    %334 = vector.broadcast %cst_51 : f32 to vector<8x128xf32>
    %335 = arith.addf %334, %333 : vector<8x128xf32>
    %336 = arith.divf %334, %335 : vector<8x128xf32>
    %337 = math.tanh %331 : vector<8x128xf32>
    %338 = arith.select %5, %337, %336 : vector<8x128xi1>, vector<8x128xf32>
    %339 = vector.extract_strided_slice %338 {offsets = [0, 0], sizes = [8, 32], strides = [1, 1]} : vector<8x128xf32> to vector<8x32xf32>
    %340 = vector.extract_strided_slice %338 {offsets = [0, 32], sizes = [8, 32], strides = [1, 1]} : vector<8x128xf32> to vector<8x32xf32>
    %341 = vector.extract_strided_slice %338 {offsets = [0, 64], sizes = [8, 32], strides = [1, 1]} : vector<8x128xf32> to vector<8x32xf32>
    %342 = vector.extract_strided_slice %338 {offsets = [0, 96], sizes = [8, 32], strides = [1, 1]} : vector<8x128xf32> to vector<8x32xf32>
    %343 = arith.mulf %340, %325 : vector<8x32xf32>
    %344 = arith.mulf %339, %341 : vector<8x32xf32>
    %345 = arith.addf %343, %344 : vector<8x32xf32>
    %346 = math.tanh %345 : vector<8x32xf32>
    %347 = arith.mulf %342, %346 : vector<8x32xf32>
    %c0_52 = arith.constant 0 : index
    %c0_53 = arith.constant 0 : index
    %348 = vector.load %arg9[%c0_52, %c0_53] : memref<1x32xf32, #tpu.memory_space<vmem>>, vector<1x32xf32>
    %349 = vector.broadcast %348 : vector<1x32xf32> to vector<8x32xf32>
    %350 = arith.mulf %347, %349 : vector<8x32xf32>
    %cst_54 = arith.constant dense<0.000000e+00> : vector<8xf32>
    %351 = vector.multi_reduction <add>, %350, %cst_54 [1] : vector<8x32xf32> to vector<8xf32>
    %352 = vector.shape_cast %351 : vector<8xf32> to vector<8x1xf32>
    %c0_55 = arith.constant 0 : index
    %c0_56 = arith.constant 0 : index
    %353 = vector.load %arg10[%c0_55, %c0_56] : memref<1x1xf32, #tpu.memory_space<vmem>>, vector<1x1xf32>
    %354 = vector.broadcast %353 : vector<1x1xf32> to vector<8x1xf32>
    %355 = arith.addf %352, %354 : vector<8x1xf32>
    %c0_57 = arith.constant 0 : index
    %c0_58 = arith.constant 0 : index
    %356 = vector.load %arg13[%c0_57, %c0_58] : memref<8x1xf32, #tpu.memory_space<vmem>>, vector<8x1xf32>
    tpu.vector_store %arg13[%c0_57, %c0_58], %355 {strides = array<i32>} : memref<8x1xf32, #tpu.memory_space<vmem>>, vector<8x1xf32>,
    return
  }
  func.func @transform_0(%arg0: i32) -> (i32, i32) {
    %c0_i32 = arith.constant 0 : i32
    %c0_i32_0 = arith.constant 0 : i32
    %c0_i32_1 = arith.constant 0 : i32
    return %c0_i32, %c0_i32_0 : i32, i32
  }
  func.func @transform_1(%arg0: i32) -> (i32, i32) {
    %c0_i32 = arith.constant 0 : i32
    %c0_i32_0 = arith.constant 0 : i32
    %c0_i32_1 = arith.constant 0 : i32
    return %c0_i32, %c0_i32_0 : i32, i32
  }
  func.func @transform_2(%arg0: i32) -> (i32, i32) {
    %c0_i32 = arith.constant 0 : i32
    %c0_i32_0 = arith.constant 0 : i32
    %c0_i32_1 = arith.constant 0 : i32
    return %c0_i32, %c0_i32_0 : i32, i32
  }
  func.func @transform_3(%arg0: i32) -> (i32, i32) {
    %c0_i32 = arith.constant 0 : i32
    %c0_i32_0 = arith.constant 0 : i32
    %c0_i32_1 = arith.constant 0 : i32
    return %c0_i32, %c0_i32_0 : i32, i32
  }
  func.func @transform_4(%arg0: i32) -> (i32, i32) {
    %c0_i32 = arith.constant 0 : i32
    %c0_i32_0 = arith.constant 0 : i32
    %c0_i32_1 = arith.constant 0 : i32
    return %c0_i32, %c0_i32_0 : i32, i32
  }
  func.func @transform_5(%arg0: i32) -> (i32, i32) {
    %c0_i32 = arith.constant 0 : i32
    %c0_i32_0 = arith.constant 0 : i32
    %c0_i32_1 = arith.constant 0 : i32
    return %c0_i32, %c0_i32_0 : i32, i32
  }
  func.func @transform_6(%arg0: i32) -> (i32, i32) {
    %c0_i32 = arith.constant 0 : i32
    %c0_i32_0 = arith.constant 0 : i32
    %c0_i32_1 = arith.constant 0 : i32
    return %c0_i32, %c0_i32_0 : i32, i32
  }
  func.func @transform_7(%arg0: i32) -> (i32, i32) {
    %c0_i32 = arith.constant 0 : i32
    %c0_i32_0 = arith.constant 0 : i32
    %c0_i32_1 = arith.constant 0 : i32
    return %c0_i32, %c0_i32_0 : i32, i32
  }
  func.func @transform_8(%arg0: i32) -> (i32, i32) {
    %c0_i32 = arith.constant 0 : i32
    %c0_i32_0 = arith.constant 0 : i32
    %c0_i32_1 = arith.constant 0 : i32
    return %c0_i32, %c0_i32_0 : i32, i32
  }
  func.func @transform_9(%arg0: i32) -> (i32, i32) {
    %c0_i32 = arith.constant 0 : i32
    %c0_i32_0 = arith.constant 0 : i32
    %c0_i32_1 = arith.constant 0 : i32
    return %c0_i32, %c0_i32_0 : i32, i32
  }
  func.func @transform_10(%arg0: i32) -> (i32, i32) {
    %c0_i32 = arith.constant 0 : i32
    %c0_i32_0 = arith.constant 0 : i32
    %c0_i32_1 = arith.constant 0 : i32
    return %c0_i32, %c0_i32_0 : i32, i32
  }
  func.func @transform_11(%arg0: i32) -> (i32, i32) {
    %c0_i32 = arith.constant 0 : i32
    %c0_i32_0 = arith.constant 0 : i32
    %c0_i32_1 = arith.constant 0 : i32
    return %c0_i32, %c0_i32_0 : i32, i32
  }
  func.func @transform_12(%arg0: i32) -> (i32, i32) {
    %c0_i32 = arith.constant 0 : i32
    %c0_i32_0 = arith.constant 0 : i32
    %c0_i32_1 = arith.constant 0 : i32
    return %c0_i32, %c0_i32_0 : i32, i32
  }
}

</mosaic_0001>

<llo_original>
// kernel: tpu_custom_call.1
$region0: #{tpu_custom_call.1}
  #allocation0 [shape = 'u32[]', space=smem, size = 0x4, offset = 0x4, fixed_abs, tag = 'smem constant byte address 0x4 - core index']
  #allocation1 [shape = 'u32[72,128]{1,0:T(1,128)}', space=vmem, size = 0x9000, scoped, tag = 'internal scratch']
  #allocation2 [shape = 'f32[1,1]{1,0:T(1,128)S(1)}', space=vmem, size = 0x200, scoped, tag = 'scoped memory for tpu_custom_call.1']
  %s0 = inlined_call_operand.vmem [shape: f32[64,8], index: 0, kind: input, shape index: {}]
  %s1 = inlined_call_operand.vmem [shape: f32[64,8], index: 1, kind: input, shape index: {}]
  %s2 = inlined_call_operand.vmem [shape: f32[8,128], index: 2, kind: input, shape index: {}]
  %s3 = inlined_call_operand.vmem [shape: f32[32,128], index: 3, kind: input, shape index: {}]
  %s4 = inlined_call_operand.vmem [shape: f32[1,128], index: 4, kind: input, shape index: {}]
  %s5 = inlined_call_operand.vmem [shape: f32[8,128], index: 5, kind: input, shape index: {}]
  %s6 = inlined_call_operand.vmem [shape: f32[32,128], index: 6, kind: input, shape index: {}]
  %s7 = inlined_call_operand.vmem [shape: f32[1,128], index: 7, kind: input, shape index: {}]
  %s8 = inlined_call_operand.vmem [shape: f32[1,32], index: 8, kind: input, shape index: {}]
  %s9 = inlined_call_operand.<no memory space> [shape: f32[1,1], index: 9, kind: input, shape index: {}]
  %s10 = inlined_call_operand.vmem [shape: f32[8,32], index: 10, kind: input, shape index: {}]
  %s11 = inlined_call_operand.vmem [shape: f32[8,32], index: 11, kind: input, shape index: {}]
  %s12 = inlined_call_operand.vmem [shape: f32[8,1], index: 12, kind: output, shape index: {}]
  %s13 = sld [smem:[#allocation0]]
  $region58: #{tpu_custom_call.1} parent=0
    _
  %s15 = ssub.s32 1, %s13
  %s16 = scalar_select 0, %s15, %s13
  %v17 = vstv %s9
  %18 = vst [vmem:[#allocation2] sm:$0x1] %v17
  // Predicated region
  $region2: #{tpu_custom_call.1} parent=0 // pred_check
    _
  $region3: #{tpu_custom_call.1} parent=0 // pred_check_branch
    %20 = sbr.rel (0) target = $region5
  $region4: #{tpu_custom_call.1} parent=0 // pred_region
    _
  $region5: #{tpu_custom_call.1} parent=0 // pred_fallthru
    _
  // Predicated region
  $region6: #{tpu_custom_call.1} parent=0 // pred_check
    _
  $region7: #{tpu_custom_call.1} parent=0 // pred_check_branch
    %22 = sbr.rel (0) target = $region9
  $region8: #{tpu_custom_call.1} parent=0 // pred_region
    _
  $region9: #{tpu_custom_call.1} parent=0 // pred_fallthru
    _
  // Predicated region
  $region10: #{tpu_custom_call.1} parent=0 // pred_check
    _
  $region11: #{tpu_custom_call.1} parent=0 // pred_check_branch
    %24 = sbr.rel (0) target = $region13
  $region12: #{tpu_custom_call.1} parent=0 // pred_region
    _
  $region13: #{tpu_custom_call.1} parent=0 // pred_fallthru
    _
  // Predicated region
  $region14: #{tpu_custom_call.1} parent=0 // pred_check
    _
  $region15: #{tpu_custom_call.1} parent=0 // pred_check_branch
    %26 = sbr.rel (0) target = $region17
  $region16: #{tpu_custom_call.1} parent=0 // pred_region
    _
  $region17: #{tpu_custom_call.1} parent=0 // pred_fallthru
    _
  // Predicated region
  $region18: #{tpu_custom_call.1} parent=0 // pred_check
    _
  $region19: #{tpu_custom_call.1} parent=0 // pred_check_branch
    %28 = sbr.rel (0) target = $region21
  $region20: #{tpu_custom_call.1} parent=0 // pred_region
    _
  $region21: #{tpu_custom_call.1} parent=0 // pred_fallthru
    _
  // Predicated region
  $region22: #{tpu_custom_call.1} parent=0 // pred_check
    _
  $region23: #{tpu_custom_call.1} parent=0 // pred_check_branch
    %30 = sbr.rel (0) target = $region25
  $region24: #{tpu_custom_call.1} parent=0 // pred_region
    _
  $region25: #{tpu_custom_call.1} parent=0 // pred_fallthru
    _
  // Predicated region
  $region26: #{tpu_custom_call.1} parent=0 // pred_check
    _
  $region27: #{tpu_custom_call.1} parent=0 // pred_check_branch
    %32 = sbr.rel (0) target = $region29
  $region28: #{tpu_custom_call.1} parent=0 // pred_region
    _
  $region29: #{tpu_custom_call.1} parent=0 // pred_fallthru
    _
  // Predicated region
  $region30: #{tpu_custom_call.1} parent=0 // pred_check
    _
  $region31: #{tpu_custom_call.1} parent=0 // pred_check_branch
    %34 = sbr.rel (0) target = $region33
  $region32: #{tpu_custom_call.1} parent=0 // pred_region
    _
  $region33: #{tpu_custom_call.1} parent=0 // pred_fallthru
    _
  // Predicated region
  $region34: #{tpu_custom_call.1} parent=0 // pred_check
    _
  $region35: #{tpu_custom_call.1} parent=0 // pred_check_branch
    %36 = sbr.rel (0) target = $region37
  $region36: #{tpu_custom_call.1} parent=0 // pred_region
    _
  $region37: #{tpu_custom_call.1} parent=0 // pred_fallthru
    _
  // Predicated region
  $region38: #{tpu_custom_call.1} parent=0 // pred_check
    _
  $region39: #{tpu_custom_call.1} parent=0 // pred_check_branch
    %38 = sbr.rel (0) target = $region41
  $region40: #{tpu_custom_call.1} parent=0 // pred_region
    _
  $region41: #{tpu_custom_call.1} parent=0 // pred_fallthru
    _
  // Predicated region
  $region42: #{tpu_custom_call.1} parent=0 // pred_check
    _
  $region43: #{tpu_custom_call.1} parent=0 // pred_check_branch
    %40 = sbr.rel (0) target = $region45
  $region44: #{tpu_custom_call.1} parent=0 // pred_region
    _
  $region45: #{tpu_custom_call.1} parent=0 // pred_fallthru
    _
  // Predicated region
  $region46: #{tpu_custom_call.1} parent=0 // pred_check
    _
  $region47: #{tpu_custom_call.1} parent=0 // pred_check_branch
    %42 = sbr.rel (0) target = $region49
  $region48: #{tpu_custom_call.1} parent=0 // pred_region
    _
  $region49: #{tpu_custom_call.1} parent=0 // pred_fallthru
    _
  %v44 = vlaneseq
  %v45 = vand.u32 %v44, 127
  %vm46 = vcmp.ge.s32.totalorder %v45, 64
  %vm47 = vcmp.lt.s32.totalorder %v45, 96
  %vm48 = vmand %vm46, %vm47
  %v49 = vld [vmem:[%s3] sm:$0xff]
  %v50 = vld [vmem:[%s3 + $0x8] sm:$0xff]
  %v51 = vld [vmem:[%s3 + $0x10] sm:$0xff]
  %v52 = vld [vmem:[%s3 + $0x18] sm:$0xff]
  %v53 = vpack.c.bf16 %v50, %v49
  %v54 = vpack.c.bf16 %v52, %v51
  %v55 = vld [vmem:[%s0] sm:$0xff]
  %v56 = vld [vmem:[%s0 + $0x8] sm:$0xff]
  %v57 = vld [vmem:[%s0 + $0x10] sm:$0xff]
  %v58 = vld [vmem:[%s0 + $0x18] sm:$0xff]
  %v59 = vld [vmem:[%s0 + $0x20] sm:$0xff]
  %v60 = vld [vmem:[%s0 + $0x28] sm:$0xff]
  %v61 = vld [vmem:[%s0 + $0x30] sm:$0xff]
  %v62 = vld [vmem:[%s0 + $0x38] sm:$0xff]
  %v63 = vpack.c.bf16 %v56, %v55
  %v64 = vpack.c.bf16 %v58, %v57
  %v65 = vpack.c.bf16 %v60, %v59
  %v66 = vpack.c.bf16 %v62, %v61
  %v67 = vld [vmem:[%s2] sm:$0xff]
  %v68 = vpack.c.bf16 %v67, %v67
  %v69 = vld [vmem:[%s4] sm:$0x1]
  %v71 = vperm.slane %v69, 0
  %vm73 = vcmask 64512
  %v75 = vsel %vm73, %v63, 0
  %v78 = vsel %vm73, %v64, 0
  %v81 = vsel %vm73, %v65, 0
  %v84 = vsel %vm73, %v66, 0
  %vm86 = vcmask 1043456
  %v88 = vsel %vm86, %v68, 0
  %90 = vmatpush.bf16.msra.mxu0 0
  %91 = vmatpush.bf16.msra.mxu0 0
  %92 = vmatpush.bf16.msra.mxu0 0
  %93 = vmatpush.bf16.msra.mxu0 0
  %94 = vmatpush.bf16.msra.mxu0 0
  %95 = vmatpush.bf16.msra.mxu0 0
  %96 = vmatpush.bf16.msra.mxu0 0
  %97 = vmatpush.bf16.msra.mxu0 %v88
  %98 = vmatmul.bf16.gmra.mxu0 %v75
  %v99 = vpop.f32.mrf.mxu0
  %v100 = vadd.f32 %v71, %v99
  %v101 = vpop.f32.mrf.mxu0
  %v102 = vadd.f32 %v71, %v101
  %103 = vmatmul.bf16.gmra.mxu0 %v78
  %v104 = vpop.f32.mrf.mxu0
  %v105 = vadd.f32 %v71, %v104
  %v106 = vpop.f32.mrf.mxu0
  %v107 = vadd.f32 %v71, %v106
  %108 = vmatmul.bf16.gmra.mxu0 %v81
  %v109 = vpop.f32.mrf.mxu0
  %v110 = vadd.f32 %v71, %v109
  %v111 = vpop.f32.mrf.mxu0
  %v112 = vadd.f32 %v71, %v111
  %113 = vmatmul.bf16.gmra.mxu0 %v84
  %v114 = vpop.f32.mrf.mxu0
  %v115 = vadd.f32 %v71, %v114
  %v116 = vpop.f32.mrf.mxu0
  %v117 = vadd.f32 %v71, %v116
  %118 = vdwg.mxu0
  %v119 = vld [vmem:[%s10] sm:$0xff]
  %v120 = vld [vmem:[%s11] sm:$0xff]
  %v121 = vpack.c.bf16 %v119, %v119
  %vm122 = vcmask 261120
  %v124 = vsel %vm122, %v121, 0
  %126 = vmatpush.bf16.msra.mxu0 0
  %127 = vmatpush.bf16.msra.mxu0 0
  %128 = vmatpush.bf16.msra.mxu0 0
  %129 = vmatpush.bf16.msra.mxu0 0
  %130 = vmatpush.bf16.msra.mxu0 0
  %131 = vmatpush.bf16.msra.mxu0 0
  %132 = vmatpush.bf16.msra.mxu0 %v54
  %133 = vmatpush.bf16.msra.mxu0 %v53
  %134 = vmatmul.bf16.gmra.mxu0 %v124
  %v135 = vpop.f32.mrf.mxu0
  %v136 = vadd.f32 0.0, %v135
  %v137 = vpop.f32.mrf.mxu0
  %138 = vdwg.mxu0
  %v139 = vadd.f32 %v100, %v136
  %v140 = vxor.u32 %v139, 2147483648
  %v141 = vmul.f32 %v140, 1.442695
  %v142 = vpow.pop %v141
  %v143 = vadd.f32 %v142, 1.0
  %v144 = vrcp.pop %v143
  %v145 = vmul.f32 %v143, %v144
  %v146 = vsub.f32 1.0, %v145
  %v147 = vmul.f32 %v144, %v146
  %v148 = vadd.f32 %v144, %v147
  %vm149 = vweird.f32 %v143
  %vm150 = vweird.f32 %v144
  %vm151 = vmor %vm149, %vm150
  %v152 = vsel %vm151, %v144, %v148
  %v153 = vand.u32 2147483647, %v143
  %vm154 = vcmp.eq.f32.partialorder %v153, 8.507059e+37
  %v155 = vand.u32 %v143, 2147483648
  %v156 = vor.u32 1.1754944e-38, %v155
  %v157 = vsel %vm154, %v156, %v152
  %v158 = vmul.f32 1.0, %v157
  %v159 = vtanh.pop %v139
  %v160 = vsel %vm48, %v159, %v158
  %162 = vrot.lane.b32.xlu0 %v120, 32
  %v163 = vpop.permute.xlu0 %162
  %v165 = vmul.f32 %v160, %v163
  %167 = vrot.lane.b32.xlu0 %v160, 64
  %v168 = vpop.permute.xlu0 %167
  %v170 = vmul.f32 %v160, %v168
  %172 = vrot.lane.b32.xlu0 %v170, 32
  %v173 = vpop.permute.xlu0 %172
  %v175 = vadd.f32 %v165, %v173
  %v176 = vtanh.pop %v175
  %178 = vrot.lane.b32.xlu0 %v176, 64
  %v179 = vpop.permute.xlu0 %178
  %v181 = vmul.f32 %v160, %v179
  %v182 = vpack.c.bf16 %v181, %v181
  %184 = vrot.lane.b32.xlu0 %v182, 32
  %v185 = vpop.permute.xlu0 %184
  %v187 = vsel %vm122, %v185, 0
  %189 = vmatpush.bf16.msra.mxu0 0
  %190 = vmatpush.bf16.msra.mxu0 0
  %191 = vmatpush.bf16.msra.mxu0 0
  %192 = vmatpush.bf16.msra.mxu0 0
  %193 = vmatpush.bf16.msra.mxu0 0
  %194 = vmatpush.bf16.msra.mxu0 0
  %195 = vmatpush.bf16.msra.mxu0 %v54
  %196 = vmatpush.bf16.msra.mxu0 %v53
  %197 = vmatmul.bf16.gmra.mxu0 %v187
  %v198 = vpop.f32.mrf.mxu0
  %v199 = vadd.f32 0.0, %v198
  %v200 = vpop.f32.mrf.mxu0
  %201 = vdwg.mxu0
  %v202 = vadd.f32 %v102, %v199
  %v203 = vxor.u32 %v202, 2147483648
  %v204 = vmul.f32 %v203, 1.442695
  %v205 = vpow.pop %v204
  %v206 = vadd.f32 %v205, 1.0
  %v207 = vrcp.pop %v206
  %v208 = vmul.f32 %v206, %v207
  %v209 = vsub.f32 1.0, %v208
  %v210 = vmul.f32 %v207, %v209
  %v211 = vadd.f32 %v207, %v210
  %vm212 = vweird.f32 %v206
  %vm213 = vweird.f32 %v207
  %vm214 = vmor %vm212, %vm213
  %v215 = vsel %vm214, %v207, %v211
  %v216 = vand.u32 2147483647, %v206
  %vm217 = vcmp.eq.f32.partialorder %v216, 8.507059e+37
  %v218 = vand.u32 %v206, 2147483648
  %v219 = vor.u32 1.1754944e-38, %v218
  %v220 = vsel %vm217, %v219, %v215
  %v221 = vmul.f32 1.0, %v220
  %v222 = vtanh.pop %v202
  %v223 = vsel %vm48, %v222, %v221
  %v224 = vmul.f32 %v223, %v175
  %226 = vrot.lane.b32.xlu0 %v223, 64
  %v227 = vpop.permute.xlu0 %226
  %v229 = vmul.f32 %v223, %v227
  %231 = vrot.lane.b32.xlu0 %v229, 32
  %v232 = vpop.permute.xlu0 %231
  %v234 = vadd.f32 %v224, %v232
  %v235 = vtanh.pop %v234
  %237 = vrot.lane.b32.xlu0 %v235, 64
  %v238 = vpop.permute.xlu0 %237
  %v240 = vmul.f32 %v223, %v238
  %v241 = vpack.c.bf16 %v240, %v240
  %243 = vrot.lane.b32.xlu0 %v241, 32
  %v244 = vpop.permute.xlu0 %243
  %v246 = vsel %vm122, %v244, 0
  %248 = vmatpush.bf16.msra.mxu0 0
  %249 = vmatpush.bf16.msra.mxu0 0
  %250 = vmatpush.bf16.msra.mxu0 0
  %251 = vmatpush.bf16.msra.mxu0 0
  %252 = vmatpush.bf16.msra.mxu0 0
  %253 = vmatpush.bf16.msra.mxu0 0
  %254 = vmatpush.bf16.msra.mxu0 %v54
  %255 = vmatpush.bf16.msra.mxu0 %v53
  %256 = vmatmul.bf16.gmra.mxu0 %v246
  %v257 = vpop.f32.mrf.mxu0
  %v258 = vadd.f32 0.0, %v257
  %v259 = vpop.f32.mrf.mxu0
  %260 = vdwg.mxu0
  %v261 = vadd.f32 %v105, %v258
  %v262 = vxor.u32 %v261, 2147483648
  %v263 = vmul.f32 %v262, 1.442695
  %v264 = vpow.pop %v263
  %v265 = vadd.f32 %v264, 1.0
  %v266 = vrcp.pop %v265
  %v267 = vmul.f32 %v265, %v266
  %v268 = vsub.f32 1.0, %v267
  %v269 = vmul.f32 %v266, %v268
  %v270 = vadd.f32 %v266, %v269
  %vm271 = vweird.f32 %v265
  %vm272 = vweird.f32 %v266
  %vm273 = vmor %vm271, %vm272
  %v274 = vsel %vm273, %v266, %v270
  %v275 = vand.u32 2147483647, %v265
  %vm276 = vcmp.eq.f32.partialorder %v275, 8.507059e+37
  %v277 = vand.u32 %v265, 2147483648
  %v278 = vor.u32 1.1754944e-38, %v277
  %v279 = vsel %vm276, %v278, %v274
  %v280 = vmul.f32 1.0, %v279
  %v281 = vtanh.pop %v261
  %v282 = vsel %vm48, %v281, %v280
  %v283 = vmul.f32 %v282, %v234
  %285 = vrot.lane.b32.xlu0 %v282, 64
  %v286 = vpop.permute.xlu0 %285
  %v288 = vmul.f32 %v282, %v286
  %290 = vrot.lane.b32.xlu0 %v288, 32
  %v291 = vpop.permute.xlu0 %290
  %v293 = vadd.f32 %v283, %v291
  %v294 = vtanh.pop %v293
  %296 = vrot.lane.b32.xlu0 %v294, 64
  %v297 = vpop.permute.xlu0 %296
  %v299 = vmul.f32 %v282, %v297
  %v300 = vpack.c.bf16 %v299, %v299
  %302 = vrot.lane.b32.xlu0 %v300, 32
  %v303 = vpop.permute.xlu0 %302
  %v305 = vsel %vm122, %v303, 0
  %307 = vmatpush.bf16.msra.mxu0 0
  %308 = vmatpush.bf16.msra.mxu0 0
  %309 = vmatpush.bf16.msra.mxu0 0
  %310 = vmatpush.bf16.msra.mxu0 0
  %311 = vmatpush.bf16.msra.mxu0 0
  %312 = vmatpush.bf16.msra.mxu0 0
  %313 = vmatpush.bf16.msra.mxu0 %v54
  %314 = vmatpush.bf16.msra.mxu0 %v53
  %315 = vmatmul.bf16.gmra.mxu0 %v305
  %v316 = vpop.f32.mrf.mxu0
  %v317 = vadd.f32 0.0, %v316
  %v318 = vpop.f32.mrf.mxu0
  %319 = vdwg.mxu0
  %v320 = vadd.f32 %v107, %v317
  %v321 = vxor.u32 %v320, 2147483648
  %v322 = vmul.f32 %v321, 1.442695
  %v323 = vpow.pop %v322
  %v324 = vadd.f32 %v323, 1.0
  %v325 = vrcp.pop %v324
  %v326 = vmul.f32 %v324, %v325
  %v327 = vsub.f32 1.0, %v326
  %v328 = vmul.f32 %v325, %v327
  %v329 = vadd.f32 %v325, %v328
  %vm330 = vweird.f32 %v324
  %vm331 = vweird.f32 %v325
  %vm332 = vmor %vm330, %vm331
  %v333 = vsel %vm332, %v325, %v329
  %v334 = vand.u32 2147483647, %v324
  %vm335 = vcmp.eq.f32.partialorder %v334, 8.507059e+37
  %v336 = vand.u32 %v324, 2147483648
  %v337 = vor.u32 1.1754944e-38, %v336
  %v338 = vsel %vm335, %v337, %v333
  %v339 = vmul.f32 1.0, %v338
  %v340 = vtanh.pop %v320
  %v341 = vsel %vm48, %v340, %v339
  %v342 = vmul.f32 %v341, %v293
  %344 = vrot.lane.b32.xlu0 %v341, 64
  %v345 = vpop.permute.xlu0 %344
  %v347 = vmul.f32 %v341, %v345
  %349 = vrot.lane.b32.xlu0 %v347, 32
  %v350 = vpop.permute.xlu0 %349
  %v352 = vadd.f32 %v342, %v350
  %v353 = vtanh.pop %v352
  %355 = vrot.lane.b32.xlu0 %v353, 64
  %v356 = vpop.permute.xlu0 %355
  %v358 = vmul.f32 %v341, %v356
  %v359 = vpack.c.bf16 %v358, %v358
  %361 = vrot.lane.b32.xlu0 %v359, 32
  %v362 = vpop.permute.xlu0 %361
  %v364 = vsel %vm122, %v362, 0
  %366 = vmatpush.bf16.msra.mxu0 0
  %367 = vmatpush.bf16.msra.mxu0 0
  %368 = vmatpush.bf16.msra.mxu0 0
  %369 = vmatpush.bf16.msra.mxu0 0
  %370 = vmatpush.bf16.msra.mxu0 0
  %371 = vmatpush.bf16.msra.mxu0 0
  %372 = vmatpush.bf16.msra.mxu0 %v54
  %373 = vmatpush.bf16.msra.mxu0 %v53
  %374 = vmatmul.bf16.gmra.mxu0 %v364
  %v375 = vpop.f32.mrf.mxu0
  %v376 = vadd.f32 0.0, %v375
  %v377 = vpop.f32.mrf.mxu0
  %378 = vdwg.mxu0
  %v379 = vadd.f32 %v110, %v376
  %v380 = vxor.u32 %v379, 2147483648
  %v381 = vmul.f32 %v380, 1.442695
  %v382 = vpow.pop %v381
  %v383 = vadd.f32 %v382, 1.0
  %v384 = vrcp.pop %v383
  %v385 = vmul.f32 %v383, %v384
  %v386 = vsub.f32 1.0, %v385
  %v387 = vmul.f32 %v384, %v386
  %v388 = vadd.f32 %v384, %v387
  %vm389 = vweird.f32 %v383
  %vm390 = vweird.f32 %v384
  %vm391 = vmor %vm389, %vm390
  %v392 = vsel %vm391, %v384, %v388
  %v393 = vand.u32 2147483647, %v383
  %vm394 = vcmp.eq.f32.partialorder %v393, 8.507059e+37
  %v395 = vand.u32 %v383, 2147483648
  %v396 = vor.u32 1.1754944e-38, %v395
  %v397 = vsel %vm394, %v396, %v392
  %v398 = vmul.f32 1.0, %v397
  %v399 = vtanh.pop %v379
  %v400 = vsel %vm48, %v399, %v398
  %v401 = vmul.f32 %v400, %v352
  %403 = vrot.lane.b32.xlu0 %v400, 64
  %v404 = vpop.permute.xlu0 %403
  %v406 = vmul.f32 %v400, %v404
  %408 = vrot.lane.b32.xlu0 %v406, 32
  %v409 = vpop.permute.xlu0 %408
  %v411 = vadd.f32 %v401, %v409
  %v412 = vtanh.pop %v411
  %414 = vrot.lane.b32.xlu0 %v412, 64
  %v415 = vpop.permute.xlu0 %414
  %v417 = vmul.f32 %v400, %v415
  %v418 = vpack.c.bf16 %v417, %v417
  %420 = vrot.lane.b32.xlu0 %v418, 32
  %v421 = vpop.permute.xlu0 %420
  %v423 = vsel %vm122, %v421, 0
  %425 = vmatpush.bf16.msra.mxu0 0
  %426 = vmatpush.bf16.msra.mxu0 0
  %427 = vmatpush.bf16.msra.mxu0 0
  %428 = vmatpush.bf16.msra.mxu0 0
  %429 = vmatpush.bf16.msra.mxu0 0
  %430 = vmatpush.bf16.msra.mxu0 0
  %431 = vmatpush.bf16.msra.mxu0 %v54
  %432 = vmatpush.bf16.msra.mxu0 %v53
  %433 = vmatmul.bf16.gmra.mxu0 %v423
  %v434 = vpop.f32.mrf.mxu0
  %v435 = vadd.f32 0.0, %v434
  %v436 = vpop.f32.mrf.mxu0
  %437 = vdwg.mxu0
  %v438 = vadd.f32 %v112, %v435
  %v439 = vxor.u32 %v438, 2147483648
  %v440 = vmul.f32 %v439, 1.442695
  %v441 = vpow.pop %v440
  %v442 = vadd.f32 %v441, 1.0
  %v443 = vrcp.pop %v442
  %v444 = vmul.f32 %v442, %v443
  %v445 = vsub.f32 1.0, %v444
  %v446 = vmul.f32 %v443, %v445
  %v447 = vadd.f32 %v443, %v446
  %vm448 = vweird.f32 %v442
  %vm449 = vweird.f32 %v443
  %vm450 = vmor %vm448, %vm449
  %v451 = vsel %vm450, %v443, %v447
  %v452 = vand.u32 2147483647, %v442
  %vm453 = vcmp.eq.f32.partialorder %v452, 8.507059e+37
  %v454 = vand.u32 %v442, 2147483648
  %v455 = vor.u32 1.1754944e-38, %v454
  %v456 = vsel %vm453, %v455, %v451
  %v457 = vmul.f32 1.0, %v456
  %v458 = vtanh.pop %v438
  %v459 = vsel %vm48, %v458, %v457
  %v460 = vmul.f32 %v459, %v411
  %462 = vrot.lane.b32.xlu0 %v459, 64
  %v463 = vpop.permute.xlu0 %462
  %v465 = vmul.f32 %v459, %v463
  %467 = vrot.lane.b32.xlu0 %v465, 32
  %v468 = vpop.permute.xlu0 %467
  %v470 = vadd.f32 %v460, %v468
  %v471 = vtanh.pop %v470
  %473 = vrot.lane.b32.xlu0 %v471, 64
  %v474 = vpop.permute.xlu0 %473
  %v476 = vmul.f32 %v459, %v474
  %v477 = vpack.c.bf16 %v476, %v476
  %479 = vrot.lane.b32.xlu0 %v477, 32
  %v480 = vpop.permute.xlu0 %479
  %v482 = vsel %vm122, %v480, 0
  %484 = vmatpush.bf16.msra.mxu0 0
  %485 = vmatpush.bf16.msra.mxu0 0
  %486 = vmatpush.bf16.msra.mxu0 0
  %487 = vmatpush.bf16.msra.mxu0 0
  %488 = vmatpush.bf16.msra.mxu0 0
  %489 = vmatpush.bf16.msra.mxu0 0
  %490 = vmatpush.bf16.msra.mxu0 %v54
  %491 = vmatpush.bf16.msra.mxu0 %v53
  %492 = vmatmul.bf16.gmra.mxu0 %v482
  %v493 = vpop.f32.mrf.mxu0
  %v494 = vadd.f32 0.0, %v493
  %v495 = vpop.f32.mrf.mxu0
  %496 = vdwg.mxu0
  %v497 = vadd.f32 %v115, %v494
  %v498 = vxor.u32 %v497, 2147483648
  %v499 = vmul.f32 %v498, 1.442695
  %v500 = vpow.pop %v499
  %v501 = vadd.f32 %v500, 1.0
  %v502 = vrcp.pop %v501
  %v503 = vmul.f32 %v501, %v502
  %v504 = vsub.f32 1.0, %v503
  %v505 = vmul.f32 %v502, %v504
  %v506 = vadd.f32 %v502, %v505
  %vm507 = vweird.f32 %v501
  %vm508 = vweird.f32 %v502
  %vm509 = vmor %vm507, %vm508
  %v510 = vsel %vm509, %v502, %v506
  %v511 = vand.u32 2147483647, %v501
  %vm512 = vcmp.eq.f32.partialorder %v511, 8.507059e+37
  %v513 = vand.u32 %v501, 2147483648
  %v514 = vor.u32 1.1754944e-38, %v513
  %v515 = vsel %vm512, %v514, %v510
  %v516 = vmul.f32 1.0, %v515
  %v517 = vtanh.pop %v497
  %v518 = vsel %vm48, %v517, %v516
  %v519 = vmul.f32 %v518, %v470
  %521 = vrot.lane.b32.xlu0 %v518, 64
  %v522 = vpop.permute.xlu0 %521
  %v524 = vmul.f32 %v518, %v522
  %526 = vrot.lane.b32.xlu0 %v524, 32
  %v527 = vpop.permute.xlu0 %526
  %v529 = vadd.f32 %v519, %v527
  %v530 = vtanh.pop %v529
  %532 = vrot.lane.b32.xlu0 %v530, 64
  %v533 = vpop.permute.xlu0 %532
  %v535 = vmul.f32 %v518, %v533
  %v536 = vpack.c.bf16 %v535, %v535
  %538 = vrot.lane.b32.xlu0 %v536, 32
  %v539 = vpop.permute.xlu0 %538
  %v541 = vsel %vm122, %v539, 0
  %543 = vmatpush.bf16.msra.mxu0 0
  %544 = vmatpush.bf16.msra.mxu0 0
  %545 = vmatpush.bf16.msra.mxu0 0
  %546 = vmatpush.bf16.msra.mxu0 0
  %547 = vmatpush.bf16.msra.mxu0 0
  %548 = vmatpush.bf16.msra.mxu0 0
  %549 = vmatpush.bf16.msra.mxu0 %v54
  %550 = vmatpush.bf16.msra.mxu0 %v53
  %551 = vmatmul.bf16.gmra.mxu0 %v541
  %v552 = vpop.f32.mrf.mxu0
  %v553 = vadd.f32 0.0, %v552
  %v554 = vpop.f32.mrf.mxu0
  %555 = vdwg.mxu0
  %v556 = vadd.f32 %v117, %v553
  %v557 = vxor.u32 %v556, 2147483648
  %v558 = vmul.f32 %v557, 1.442695
  %v559 = vpow.pop %v558
  %v560 = vadd.f32 %v559, 1.0
  %v561 = vrcp.pop %v560
  %v562 = vmul.f32 %v560, %v561
  %v563 = vsub.f32 1.0, %v562
  %v564 = vmul.f32 %v561, %v563
  %v565 = vadd.f32 %v561, %v564
  %vm566 = vweird.f32 %v560
  %vm567 = vweird.f32 %v561
  %vm568 = vmor %vm566, %vm567
  %v569 = vsel %vm568, %v561, %v565
  %v570 = vand.u32 2147483647, %v560
  %vm571 = vcmp.eq.f32.partialorder %v570, 8.507059e+37
  %v572 = vand.u32 %v560, 2147483648
  %v573 = vor.u32 1.1754944e-38, %v572
  %v574 = vsel %vm571, %v573, %v569
  %v575 = vmul.f32 1.0, %v574
  %v576 = vtanh.pop %v556
  %v577 = vsel %vm48, %v576, %v575
  %v578 = vmul.f32 %v577, %v529
  %580 = vrot.lane.b32.xlu0 %v577, 64
  %v581 = vpop.permute.xlu0 %580
  %v583 = vmul.f32 %v577, %v581
  %585 = vrot.lane.b32.xlu0 %v583, 32
  %v586 = vpop.permute.xlu0 %585
  %v588 = vadd.f32 %v578, %v586
  %v589 = vtanh.pop %v588
  %591 = vrot.lane.b32.xlu0 %v589, 64
  %v592 = vpop.permute.xlu0 %591
  %v594 = vmul.f32 %v577, %v592
  %v595 = vld [vmem:[%s6] sm:$0xff]
  %v596 = vld [vmem:[%s6 + $0x8] sm:$0xff]
  %v597 = vld [vmem:[%s6 + $0x10] sm:$0xff]
  %v598 = vld [vmem:[%s6 + $0x18] sm:$0xff]
  %v599 = vpack.c.bf16 %v596, %v595
  %v600 = vpack.c.bf16 %v598, %v597
  %v601 = vld [vmem:[%s1] sm:$0xff]
  %v602 = vld [vmem:[%s1 + $0x8] sm:$0xff]
  %v603 = vld [vmem:[%s1 + $0x10] sm:$0xff]
  %v604 = vld [vmem:[%s1 + $0x18] sm:$0xff]
  %v605 = vld [vmem:[%s1 + $0x20] sm:$0xff]
  %v606 = vld [vmem:[%s1 + $0x28] sm:$0xff]
  %v607 = vld [vmem:[%s1 + $0x30] sm:$0xff]
  %v608 = vld [vmem:[%s1 + $0x38] sm:$0xff]
  %v609 = vpack.c.bf16 %v602, %v601
  %v610 = vpack.c.bf16 %v604, %v603
  %v611 = vpack.c.bf16 %v606, %v605
  %v612 = vpack.c.bf16 %v608, %v607
  %v613 = vld [vmem:[%s5] sm:$0xff]
  %v614 = vpack.c.bf16 %v613, %v613
  %v615 = vld [vmem:[%s7] sm:$0x1]
  %v617 = vperm.slane %v615, 0
  %v620 = vsel %vm73, %v609, 0
  %v623 = vsel %vm73, %v610, 0
  %v626 = vsel %vm73, %v611, 0
  %v629 = vsel %vm73, %v612, 0
  %v632 = vsel %vm86, %v614, 0
  %634 = vmatpush.bf16.msra.mxu0 0
  %635 = vmatpush.bf16.msra.mxu0 0
  %636 = vmatpush.bf16.msra.mxu0 0
  %637 = vmatpush.bf16.msra.mxu0 0
  %638 = vmatpush.bf16.msra.mxu0 0
  %639 = vmatpush.bf16.msra.mxu0 0
  %640 = vmatpush.bf16.msra.mxu0 0
  %641 = vmatpush.bf16.msra.mxu0 %v632
  %642 = vmatmul.bf16.gmra.mxu0 %v620
  %v643 = vpop.f32.mrf.mxu0
  %v644 = vadd.f32 %v617, %v643
  %v645 = vpop.f32.mrf.mxu0
  %v646 = vadd.f32 %v617, %v645
  %647 = vmatmul.bf16.gmra.mxu0 %v623
  %v648 = vpop.f32.mrf.mxu0
  %v649 = vadd.f32 %v617, %v648
  %v650 = vpop.f32.mrf.mxu0
  %v651 = vadd.f32 %v617, %v650
  %652 = vmatmul.bf16.gmra.mxu0 %v626
  %v653 = vpop.f32.mrf.mxu0
  %v654 = vadd.f32 %v617, %v653
  %v655 = vpop.f32.mrf.mxu0
  %v656 = vadd.f32 %v617, %v655
  %657 = vmatmul.bf16.gmra.mxu0 %v629
  %v658 = vpop.f32.mrf.mxu0
  %v659 = vadd.f32 %v617, %v658
  %v660 = vpop.f32.mrf.mxu0
  %v661 = vadd.f32 %v617, %v660
  %662 = vdwg.mxu0
  %v663 = vpack.c.bf16 %v594, %v594
  %665 = vrot.lane.b32.xlu0 %v663, 32
  %v666 = vpop.permute.xlu0 %665
  %v668 = vsel %vm122, %v666, 0
  %670 = vmatpush.bf16.msra.mxu0 0
  %671 = vmatpush.bf16.msra.mxu0 0
  %672 = vmatpush.bf16.msra.mxu0 0
  %673 = vmatpush.bf16.msra.mxu0 0
  %674 = vmatpush.bf16.msra.mxu0 0
  %675 = vmatpush.bf16.msra.mxu0 0
  %676 = vmatpush.bf16.msra.mxu0 %v600
  %677 = vmatpush.bf16.msra.mxu0 %v599
  %678 = vmatmul.bf16.gmra.mxu0 %v668
  %v679 = vpop.f32.mrf.mxu0
  %v680 = vadd.f32 0.0, %v679
  %v681 = vpop.f32.mrf.mxu0
  %682 = vdwg.mxu0
  %v683 = vadd.f32 %v644, %v680
  %v684 = vxor.u32 %v683, 2147483648
  %v685 = vmul.f32 %v684, 1.442695
  %v686 = vpow.pop %v685
  %v687 = vadd.f32 %v686, 1.0
  %v688 = vrcp.pop %v687
  %v689 = vmul.f32 %v687, %v688
  %v690 = vsub.f32 1.0, %v689
  %v691 = vmul.f32 %v688, %v690
  %v692 = vadd.f32 %v688, %v691
  %vm693 = vweird.f32 %v687
  %vm694 = vweird.f32 %v688
  %vm695 = vmor %vm693, %vm694
  %v696 = vsel %vm695, %v688, %v692
  %v697 = vand.u32 2147483647, %v687
  %vm698 = vcmp.eq.f32.partialorder %v697, 8.507059e+37
  %v699 = vand.u32 %v687, 2147483648
  %v700 = vor.u32 1.1754944e-38, %v699
  %v701 = vsel %vm698, %v700, %v696
  %v702 = vmul.f32 1.0, %v701
  %v703 = vtanh.pop %v683
  %v704 = vsel %vm48, %v703, %v702
  %v705 = vmul.f32 %v704, %v588
  %707 = vrot.lane.b32.xlu0 %v704, 64
  %v708 = vpop.permute.xlu0 %707
  %v710 = vmul.f32 %v704, %v708
  %712 = vrot.lane.b32.xlu0 %v710, 32
  %v713 = vpop.permute.xlu0 %712
  %v715 = vadd.f32 %v705, %v713
  %v716 = vtanh.pop %v715
  %718 = vrot.lane.b32.xlu0 %v716, 64
  %v719 = vpop.permute.xlu0 %718
  %v721 = vmul.f32 %v704, %v719
  %v722 = vpack.c.bf16 %v721, %v721
  %724 = vrot.lane.b32.xlu0 %v722, 32
  %v725 = vpop.permute.xlu0 %724
  %v727 = vsel %vm122, %v725, 0
  %729 = vmatpush.bf16.msra.mxu0 0
  %730 = vmatpush.bf16.msra.mxu0 0
  %731 = vmatpush.bf16.msra.mxu0 0
  %732 = vmatpush.bf16.msra.mxu0 0
  %733 = vmatpush.bf16.msra.mxu0 0
  %734 = vmatpush.bf16.msra.mxu0 0
  %735 = vmatpush.bf16.msra.mxu0 %v600
  %736 = vmatpush.bf16.msra.mxu0 %v599
  %737 = vmatmul.bf16.gmra.mxu0 %v727
  %v738 = vpop.f32.mrf.mxu0
  %v739 = vadd.f32 0.0, %v738
  %v740 = vpop.f32.mrf.mxu0
  %741 = vdwg.mxu0
  %v742 = vadd.f32 %v646, %v739
  %v743 = vxor.u32 %v742, 2147483648
  %v744 = vmul.f32 %v743, 1.442695
  %v745 = vpow.pop %v744
  %v746 = vadd.f32 %v745, 1.0
  %v747 = vrcp.pop %v746
  %v748 = vmul.f32 %v746, %v747
  %v749 = vsub.f32 1.0, %v748
  %v750 = vmul.f32 %v747, %v749
  %v751 = vadd.f32 %v747, %v750
  %vm752 = vweird.f32 %v746
  %vm753 = vweird.f32 %v747
  %vm754 = vmor %vm752, %vm753
  %v755 = vsel %vm754, %v747, %v751
  %v756 = vand.u32 2147483647, %v746
  %vm757 = vcmp.eq.f32.partialorder %v756, 8.507059e+37
  %v758 = vand.u32 %v746, 2147483648
  %v759 = vor.u32 1.1754944e-38, %v758
  %v760 = vsel %vm757, %v759, %v755
  %v761 = vmul.f32 1.0, %v760
  %v762 = vtanh.pop %v742
  %v763 = vsel %vm48, %v762, %v761
  %v764 = vmul.f32 %v763, %v715
  %766 = vrot.lane.b32.xlu0 %v763, 64
  %v767 = vpop.permute.xlu0 %766
  %v769 = vmul.f32 %v763, %v767
  %771 = vrot.lane.b32.xlu0 %v769, 32
  %v772 = vpop.permute.xlu0 %771
  %v774 = vadd.f32 %v764, %v772
  %v775 = vtanh.pop %v774
  %777 = vrot.lane.b32.xlu0 %v775, 64
  %v778 = vpop.permute.xlu0 %777
  %v780 = vmul.f32 %v763, %v778
  %v781 = vpack.c.bf16 %v780, %v780
  %783 = vrot.lane.b32.xlu0 %v781, 32
  %v784 = vpop.permute.xlu0 %783
  %v786 = vsel %vm122, %v784, 0
  %788 = vmatpush.bf16.msra.mxu0 0
  %789 = vmatpush.bf16.msra.mxu0 0
  %790 = vmatpush.bf16.msra.mxu0 0
  %791 = vmatpush.bf16.msra.mxu0 0
  %792 = vmatpush.bf16.msra.mxu0 0
  %793 = vmatpush.bf16.msra.mxu0 0
  %794 = vmatpush.bf16.msra.mxu0 %v600
  %795 = vmatpush.bf16.msra.mxu0 %v599
  %796 = vmatmul.bf16.gmra.mxu0 %v786
  %v797 = vpop.f32.mrf.mxu0
  %v798 = vadd.f32 0.0, %v797
  %v799 = vpop.f32.mrf.mxu0
  %800 = vdwg.mxu0
  %v801 = vadd.f32 %v649, %v798
  %v802 = vxor.u32 %v801, 2147483648
  %v803 = vmul.f32 %v802, 1.442695
  %v804 = vpow.pop %v803
  %v805 = vadd.f32 %v804, 1.0
  %v806 = vrcp.pop %v805
  %v807 = vmul.f32 %v805, %v806
  %v808 = vsub.f32 1.0, %v807
  %v809 = vmul.f32 %v806, %v808
  %v810 = vadd.f32 %v806, %v809
  %vm811 = vweird.f32 %v805
  %vm812 = vweird.f32 %v806
  %vm813 = vmor %vm811, %vm812
  %v814 = vsel %vm813, %v806, %v810
  %v815 = vand.u32 2147483647, %v805
  %vm816 = vcmp.eq.f32.partialorder %v815, 8.507059e+37
  %v817 = vand.u32 %v805, 2147483648
  %v818 = vor.u32 1.1754944e-38, %v817
  %v819 = vsel %vm816, %v818, %v814
  %v820 = vmul.f32 1.0, %v819
  %v821 = vtanh.pop %v801
  %v822 = vsel %vm48, %v821, %v820
  %v823 = vmul.f32 %v822, %v774
  %825 = vrot.lane.b32.xlu0 %v822, 64
  %v826 = vpop.permute.xlu0 %825
  %v828 = vmul.f32 %v822, %v826
  %830 = vrot.lane.b32.xlu0 %v828, 32
  %v831 = vpop.permute.xlu0 %830
  %v833 = vadd.f32 %v823, %v831
  %v834 = vtanh.pop %v833
  %836 = vrot.lane.b32.xlu0 %v834, 64
  %v837 = vpop.permute.xlu0 %836
  %v839 = vmul.f32 %v822, %v837
  %v840 = vpack.c.bf16 %v839, %v839
  %842 = vrot.lane.b32.xlu0 %v840, 32
  %v843 = vpop.permute.xlu0 %842
  %v845 = vsel %vm122, %v843, 0
  %847 = vmatpush.bf16.msra.mxu0 0
  %848 = vmatpush.bf16.msra.mxu0 0
  %849 = vmatpush.bf16.msra.mxu0 0
  %850 = vmatpush.bf16.msra.mxu0 0
  %851 = vmatpush.bf16.msra.mxu0 0
  %852 = vmatpush.bf16.msra.mxu0 0
  %853 = vmatpush.bf16.msra.mxu0 %v600
  %854 = vmatpush.bf16.msra.mxu0 %v599
  %855 = vmatmul.bf16.gmra.mxu0 %v845
  %v856 = vpop.f32.mrf.mxu0
  %v857 = vadd.f32 0.0, %v856
  %v858 = vpop.f32.mrf.mxu0
  %859 = vdwg.mxu0
  %v860 = vadd.f32 %v651, %v857
  %v861 = vxor.u32 %v860, 2147483648
  %v862 = vmul.f32 %v861, 1.442695
  %v863 = vpow.pop %v862
  %v864 = vadd.f32 %v863, 1.0
  %v865 = vrcp.pop %v864
  %v866 = vmul.f32 %v864, %v865
  %v867 = vsub.f32 1.0, %v866
  %v868 = vmul.f32 %v865, %v867
  %v869 = vadd.f32 %v865, %v868
  %vm870 = vweird.f32 %v864
  %vm871 = vweird.f32 %v865
  %vm872 = vmor %vm870, %vm871
  %v873 = vsel %vm872, %v865, %v869
  %v874 = vand.u32 2147483647, %v864
  %vm875 = vcmp.eq.f32.partialorder %v874, 8.507059e+37
  %v876 = vand.u32 %v864, 2147483648
  %v877 = vor.u32 1.1754944e-38, %v876
  %v878 = vsel %vm875, %v877, %v873
  %v879 = vmul.f32 1.0, %v878
  %v880 = vtanh.pop %v860
  %v881 = vsel %vm48, %v880, %v879
  %v882 = vmul.f32 %v881, %v833
  %884 = vrot.lane.b32.xlu0 %v881, 64
  %v885 = vpop.permute.xlu0 %884
  %v887 = vmul.f32 %v881, %v885
  %889 = vrot.lane.b32.xlu0 %v887, 32
  %v890 = vpop.permute.xlu0 %889
  %v892 = vadd.f32 %v882, %v890
  %v893 = vtanh.pop %v892
  %895 = vrot.lane.b32.xlu0 %v893, 64
  %v896 = vpop.permute.xlu0 %895
  %v898 = vmul.f32 %v881, %v896
  %v899 = vpack.c.bf16 %v898, %v898
  %901 = vrot.lane.b32.xlu0 %v899, 32
  %v902 = vpop.permute.xlu0 %901
  %v904 = vsel %vm122, %v902, 0
  %906 = vmatpush.bf16.msra.mxu0 0
  %907 = vmatpush.bf16.msra.mxu0 0
  %908 = vmatpush.bf16.msra.mxu0 0
  %909 = vmatpush.bf16.msra.mxu0 0
  %910 = vmatpush.bf16.msra.mxu0 0
  %911 = vmatpush.bf16.msra.mxu0 0
  %912 = vmatpush.bf16.msra.mxu0 %v600
  %913 = vmatpush.bf16.msra.mxu0 %v599
  %914 = vmatmul.bf16.gmra.mxu0 %v904
  %v915 = vpop.f32.mrf.mxu0
  %v916 = vadd.f32 0.0, %v915
  %v917 = vpop.f32.mrf.mxu0
  %918 = vdwg.mxu0
  %v919 = vadd.f32 %v654, %v916
  %v920 = vxor.u32 %v919, 2147483648
  %v921 = vmul.f32 %v920, 1.442695
  %v922 = vpow.pop %v921
  %v923 = vadd.f32 %v922, 1.0
  %v924 = vrcp.pop %v923
  %v925 = vmul.f32 %v923, %v924
  %v926 = vsub.f32 1.0, %v925
  %v927 = vmul.f32 %v924, %v926
  %v928 = vadd.f32 %v924, %v927
  %vm929 = vweird.f32 %v923
  %vm930 = vweird.f32 %v924
  %vm931 = vmor %vm929, %vm930
  %v932 = vsel %vm931, %v924, %v928
  %v933 = vand.u32 2147483647, %v923
  %vm934 = vcmp.eq.f32.partialorder %v933, 8.507059e+37
  %v935 = vand.u32 %v923, 2147483648
  %v936 = vor.u32 1.1754944e-38, %v935
  %v937 = vsel %vm934, %v936, %v932
  %v938 = vmul.f32 1.0, %v937
  %v939 = vtanh.pop %v919
  %v940 = vsel %vm48, %v939, %v938
  %v941 = vmul.f32 %v940, %v892
  %943 = vrot.lane.b32.xlu0 %v940, 64
  %v944 = vpop.permute.xlu0 %943
  %v946 = vmul.f32 %v940, %v944
  %948 = vrot.lane.b32.xlu0 %v946, 32
  %v949 = vpop.permute.xlu0 %948
  %v951 = vadd.f32 %v941, %v949
  %v952 = vtanh.pop %v951
  %954 = vrot.lane.b32.xlu0 %v952, 64
  %v955 = vpop.permute.xlu0 %954
  %v957 = vmul.f32 %v940, %v955
  %v958 = vpack.c.bf16 %v957, %v957
  %960 = vrot.lane.b32.xlu0 %v958, 32
  %v961 = vpop.permute.xlu0 %960
  %v963 = vsel %vm122, %v961, 0
  %965 = vmatpush.bf16.msra.mxu0 0
  %966 = vmatpush.bf16.msra.mxu0 0
  %967 = vmatpush.bf16.msra.mxu0 0
  %968 = vmatpush.bf16.msra.mxu0 0
  %969 = vmatpush.bf16.msra.mxu0 0
  %970 = vmatpush.bf16.msra.mxu0 0
  %971 = vmatpush.bf16.msra.mxu0 %v600
  %972 = vmatpush.bf16.msra.mxu0 %v599
  %973 = vmatmul.bf16.gmra.mxu0 %v963
  %v974 = vpop.f32.mrf.mxu0
  %v975 = vadd.f32 0.0, %v974
  %v976 = vpop.f32.mrf.mxu0
  %977 = vdwg.mxu0
  %v978 = vadd.f32 %v656, %v975
  %v979 = vxor.u32 %v978, 2147483648
  %v980 = vmul.f32 %v979, 1.442695
  %v981 = vpow.pop %v980
  %v982 = vadd.f32 %v981, 1.0
  %v983 = vrcp.pop %v982
  %v984 = vmul.f32 %v982, %v983
  %v985 = vsub.f32 1.0, %v984
  %v986 = vmul.f32 %v983, %v985
  %v987 = vadd.f32 %v983, %v986
  %vm988 = vweird.f32 %v982
  %vm989 = vweird.f32 %v983
  %vm990 = vmor %vm988, %vm989
  %v991 = vsel %vm990, %v983, %v987
  %v992 = vand.u32 2147483647, %v982
  %vm993 = vcmp.eq.f32.partialorder %v992, 8.507059e+37
  %v994 = vand.u32 %v982, 2147483648
  %v995 = vor.u32 1.1754944e-38, %v994
  %v996 = vsel %vm993, %v995, %v991
  %v997 = vmul.f32 1.0, %v996
  %v998 = vtanh.pop %v978
  %v999 = vsel %vm48, %v998, %v997
  %v1000 = vmul.f32 %v999, %v951
  %1002 = vrot.lane.b32.xlu0 %v999, 64
  %v1003 = vpop.permute.xlu0 %1002
  %v1005 = vmul.f32 %v999, %v1003
  %1007 = vrot.lane.b32.xlu0 %v1005, 32
  %v1008 = vpop.permute.xlu0 %1007
  %v1010 = vadd.f32 %v1000, %v1008
  %v1011 = vtanh.pop %v1010
  %1013 = vrot.lane.b32.xlu0 %v1011, 64
  %v1014 = vpop.permute.xlu0 %1013
  %v1016 = vmul.f32 %v999, %v1014
  %v1017 = vpack.c.bf16 %v1016, %v1016
  %1019 = vrot.lane.b32.xlu0 %v1017, 32
  %v1020 = vpop.permute.xlu0 %1019
  %v1022 = vsel %vm122, %v1020, 0
  %1024 = vmatpush.bf16.msra.mxu0 0
  %1025 = vmatpush.bf16.msra.mxu0 0
  %1026 = vmatpush.bf16.msra.mxu0 0
  %1027 = vmatpush.bf16.msra.mxu0 0
  %1028 = vmatpush.bf16.msra.mxu0 0
  %1029 = vmatpush.bf16.msra.mxu0 0
  %1030 = vmatpush.bf16.msra.mxu0 %v600
  %1031 = vmatpush.bf16.msra.mxu0 %v599
  %1032 = vmatmul.bf16.gmra.mxu0 %v1022
  %v1033 = vpop.f32.mrf.mxu0
  %v1034 = vadd.f32 0.0, %v1033
  %v1035 = vpop.f32.mrf.mxu0
  %1036 = vdwg.mxu0
  %v1037 = vadd.f32 %v659, %v1034
  %v1038 = vxor.u32 %v1037, 2147483648
  %v1039 = vmul.f32 %v1038, 1.442695
  %v1040 = vpow.pop %v1039
  %v1041 = vadd.f32 %v1040, 1.0
  %v1042 = vrcp.pop %v1041
  %v1043 = vmul.f32 %v1041, %v1042
  %v1044 = vsub.f32 1.0, %v1043
  %v1045 = vmul.f32 %v1042, %v1044
  %v1046 = vadd.f32 %v1042, %v1045
  %vm1047 = vweird.f32 %v1041
  %vm1048 = vweird.f32 %v1042
  %vm1049 = vmor %vm1047, %vm1048
  %v1050 = vsel %vm1049, %v1042, %v1046
  %v1051 = vand.u32 2147483647, %v1041
  %vm1052 = vcmp.eq.f32.partialorder %v1051, 8.507059e+37
  %v1053 = vand.u32 %v1041, 2147483648
  %v1054 = vor.u32 1.1754944e-38, %v1053
  %v1055 = vsel %vm1052, %v1054, %v1050
  %v1056 = vmul.f32 1.0, %v1055
  %v1057 = vtanh.pop %v1037
  %v1058 = vsel %vm48, %v1057, %v1056
  %v1059 = vmul.f32 %v1058, %v1010
  %1061 = vrot.lane.b32.xlu0 %v1058, 64
  %v1062 = vpop.permute.xlu0 %1061
  %v1064 = vmul.f32 %v1058, %v1062
  %1066 = vrot.lane.b32.xlu0 %v1064, 32
  %v1067 = vpop.permute.xlu0 %1066
  %v1069 = vadd.f32 %v1059, %v1067
  %v1070 = vtanh.pop %v1069
  %1072 = vrot.lane.b32.xlu0 %v1070, 64
  %v1073 = vpop.permute.xlu0 %1072
  %v1075 = vmul.f32 %v1058, %v1073
  %v1076 = vpack.c.bf16 %v1075, %v1075
  %1078 = vrot.lane.b32.xlu0 %v1076, 32
  %v1079 = vpop.permute.xlu0 %1078
  %v1081 = vsel %vm122, %v1079, 0
  %1083 = vmatpush.bf16.msra.mxu0 0
  %1084 = vmatpush.bf16.msra.mxu0 0
  %1085 = vmatpush.bf16.msra.mxu0 0
  %1086 = vmatpush.bf16.msra.mxu0 0
  %1087 = vmatpush.bf16.msra.mxu0 0
  %1088 = vmatpush.bf16.msra.mxu0 0
  %1089 = vmatpush.bf16.msra.mxu0 %v600
  %1090 = vmatpush.bf16.msra.mxu0 %v599
  %1091 = vmatmul.bf16.gmra.mxu0 %v1081
  %v1092 = vpop.f32.mrf.mxu0
  %v1093 = vadd.f32 0.0, %v1092
  %v1094 = vpop.f32.mrf.mxu0
  %1095 = vdwg.mxu0
  %v1096 = vadd.f32 %v661, %v1093
  %v1097 = vxor.u32 %v1096, 2147483648
  %v1098 = vmul.f32 %v1097, 1.442695
  %v1099 = vpow.pop %v1098
  %v1100 = vadd.f32 %v1099, 1.0
  %v1101 = vrcp.pop %v1100
  %v1102 = vmul.f32 %v1100, %v1101
  %v1103 = vsub.f32 1.0, %v1102
  %v1104 = vmul.f32 %v1101, %v1103
  %v1105 = vadd.f32 %v1101, %v1104
  %vm1106 = vweird.f32 %v1100
  %vm1107 = vweird.f32 %v1101
  %vm1108 = vmor %vm1106, %vm1107
  %v1109 = vsel %vm1108, %v1101, %v1105
  %v1110 = vand.u32 2147483647, %v1100
  %vm1111 = vcmp.eq.f32.partialorder %v1110, 8.507059e+37
  %v1112 = vand.u32 %v1100, 2147483648
  %v1113 = vor.u32 1.1754944e-38, %v1112
  %v1114 = vsel %vm1111, %v1113, %v1109
  %v1115 = vmul.f32 1.0, %v1114
  %v1116 = vtanh.pop %v1096
  %v1117 = vsel %vm48, %v1116, %v1115
  %v1118 = vmul.f32 %v1117, %v1069
  %1120 = vrot.lane.b32.xlu0 %v1117, 64
  %v1121 = vpop.permute.xlu0 %1120
  %v1123 = vmul.f32 %v1117, %v1121
  %1125 = vrot.lane.b32.xlu0 %v1123, 32
  %v1126 = vpop.permute.xlu0 %1125
  %v1128 = vadd.f32 %v1118, %v1126
  %v1129 = vtanh.pop %v1128
  %1131 = vrot.lane.b32.xlu0 %v1129, 64
  %v1132 = vpop.permute.xlu0 %1131
  %v1134 = vmul.f32 %v1117, %v1132
  %v1135 = vld [vmem:[%s8] sm:$0x1]
  %v1137 = vperm.slane %v1135, 0
  %1138 = vrot.lane.b32.xlu0 %v1137, 96
  %v1139 = vpop.permute.xlu0 %1138
  %v1141 = vmul.f32 %v1134, %v1139
  %1143 = vrot.lane.b32.xlu0 %v1141, 32
  %v1144 = vpop.permute.xlu0 %1143
  %v1146 = vsel %vm122, %v1144, 0.0
  %1147 = vadd.xlane.f32.xlu0 %v1146
  %v1148 = vpop.xlane.xlu0 %1147
  %v1149 = vld [vmem:[#allocation2] sm:$0x1]
  %v1151 = vperm.slane %v1149, 0
  %v1153 = vadd.f32 %v1148, %v1151
  %vm1154 = vcmask 7168
  %1155 = vst.msk [vmem:[%s12] sm:$0xff] %vm1154, %v1153
  // Predicated region
  $region50: #{tpu_custom_call.1} parent=0 // pred_check
    _
  $region51: #{tpu_custom_call.1} parent=0 // pred_check_branch
    %1157 = sbr.rel (0) target = $region53
  $region52: #{tpu_custom_call.1} parent=0 // pred_region
    _
  $region53: #{tpu_custom_call.1} parent=0 // pred_fallthru
    _
  // Predicated region
  $region54: #{tpu_custom_call.1} parent=0 // pred_check
    _
  $region55: #{tpu_custom_call.1} parent=0 // pred_check_branch
    %1159 = sbr.rel (0) target = $region57
  $region56: #{tpu_custom_call.1} parent=0 // pred_region
    _
  $region57: #{tpu_custom_call.1} parent=0 // pred_fallthru
    _

</llo_original>
